<compile_context>
chip_gen: v7x
topology: tpu7x:2x2x1
jax: 0.10.0
libtpu: 0.0.40
codegen_flags: <defaults>
</compile_context>

<pallas_src>
import functools

import jax
import jax.numpy as jnp
from jax import lax
from jax.experimental import pallas as pl
from jax.experimental.pallas import tpu as pltpu

_BN_EPS = 1e-5


# ----------------------------------------------------------------------------
# In-kernel helper: 3x3 "same" conv in channel-first flat layout, one matmul.
# ----------------------------------------------------------------------------
def _conv3x3_flat(a, w16, bias, Wc, mask_l, mask_r, relu):
    """a: (Cin, L) activation (any float dtype); w16: (Cout, 9*Cin) bf16
    tap-major (w16[co, (kh*3+kw)*Cin + ci]); bias: (Cout, 1) f32;
    mask_l/mask_r: (1, L) bool column masks (col>=1 / col<Wc-1).
    Returns (Cout, L) f32."""
    C, L = a.shape
    a16 = a.astype(jnp.bfloat16)

    # Zero-pad along the flat (lane) axis so every tap shift is a zero-filled
    # static slice: shift s = dy*Wc + dx, |s| <= Wc + 1.  Vertical edges are
    # handled by the zero pad; horizontal edges by the column masks.
    P = Wc + 1
    zpad = jnp.zeros((C, P), jnp.bfloat16)
    ap = jnp.concatenate([zpad, a16, zpad], axis=1)          # (C, L + 2P)

    parts = []
    for dy in (-1, 0, 1):
        for dx in (-1, 0, 1):
            s = dy * Wc + dx
            sl = lax.slice(ap, (0, P + s), (C, P + s + L))   # zero-filled shift
            if dx == -1:
                sl = jnp.where(mask_l, sl, jnp.zeros_like(sl))
            elif dx == 1:
                sl = jnp.where(mask_r, sl, jnp.zeros_like(sl))
            parts.append(sl)
    patches = jnp.concatenate(parts, axis=0)                 # (9*C, L)

    out = lax.dot_general(w16, patches, (((1,), (0,)), ((), ())),
                          preferred_element_type=jnp.float32)  # (Cout, L)
    out = out + bias
    if relu:
        out = jnp.maximum(out, 0.0)
    return out


# ----------------------------------------------------------------------------
# Fused decoder-block kernel (one batch element per grid step)
# ----------------------------------------------------------------------------
def _decoder_kernel(x_ref, skip_ref, g_ref, wu_ref, bu_ref,
                    w1_ref, b1_ref, w2_ref, b2_ref, o_ref, *, H2, W2):
    # x_ref:    (1, Cin, H*W)    bf16  low-res input, flattened spatial
    # skip_ref: (1, Cin, 2H*2W)  bf16  skip connection, flattened spatial
    # g_ref:    (H*W, 2H*2W)     bf16  constant 0/1 stride-2 zero-stuffing matrix
    # wu_ref:   (Cin, 9*Cin)     bf16  ConvTranspose2d as equivalent 3x3 conv
    # bu_ref:   (Cin, 1)         f32
    # w1_ref:   (Cmid, 9*2Cin)   bf16  conv1 weights with BN1 scale folded in
    # b1_ref:   (Cmid, 1)        f32   folded conv1 bias + BN1 shift
    # w2_ref:   (Cout, 9*Cmid)   bf16  conv2 weights with BN2 scale folded in
    # b2_ref:   (Cout, 1)        f32
    # o_ref:    (1, Cout, 2H*2W) f32
    L2 = H2 * W2

    # Column masks for the 3x3 convs -- all three convs run on the (H2, W2)
    # grid, so the iota + comparisons are computed once and shared.
    col = lax.broadcasted_iota(jnp.int32, (1, L2), 1) % W2   # output column id
    mask_l = col >= 1
    mask_r = col < (W2 - 1)

    x16 = x_ref[0]                                           # (Cin, H*W) bf16

    # Stride-2 zero-stuffing (transposed-conv upsampling) as a single matmul.
    d = lax.dot_general(x16, g_ref[...], (((1,), (0,)), ((), ())),
                        preferred_element_type=jnp.float32)  # (Cin, 2H*2W)

    # Upsample conv (equivalent 3x3 same-conv on the zero-stuffed tensor).
    up = _conv3x3_flat(d, wu_ref[...], bu_ref[...], W2, mask_l, mask_r,
                       relu=False)                           # (Cin, L2) f32

    # Channel concat with the skip connection (stays in VMEM, bf16).
    cat = jnp.concatenate([up.astype(jnp.bfloat16), skip_ref[0]], axis=0)

    # DoubleConv: [Conv3x3 -> BN(eval, folded) -> ReLU] x 2.
    h1 = _conv3x3_flat(cat, w1_ref[...], b1_ref[...], W2, mask_l, mask_r,
                       relu=True)
    out = _conv3x3_flat(h1, w2_ref[...], b2_ref[...], W2, mask_l, mask_r,
                        relu=True)

    o_ref[0] = out.astype(o_ref.dtype)


# ----------------------------------------------------------------------------
# Wrapper: layout prep + weight/BN pre-transforms + pallas_call
# ----------------------------------------------------------------------------
def decoder_block_forward(x_nchw, skip_nchw, p):
    N, Cin, H, W = x_nchw.shape
    H2, W2 = 2 * H, 2 * W
    L, L2 = H * W, H2 * W2
    Cmid = p["w1"].shape[0]
    Cout = p["w2"].shape[0]
    bf = jnp.bfloat16

    # Flatten spatial dims; no NCHW<->NHWC transposes needed (kernel is C-first).
    # Ship activations in bf16 (matmul operands are bf16 anyway) -> half the DMA.
    x = x_nchw.reshape(N, Cin, L).astype(bf)
    skip = skip_nchw.reshape(N, Cin, L2).astype(bf)

    # --- weight / BN pre-transforms (tiny, done once outside the hot path) ---
    # ConvTranspose2d weight (Cin, Cin, 3, 3) -> equivalent-conv (Cin, 9*Cin)
    wtf = p["wt"][:, :, ::-1, ::-1]                          # flip spatially
    wu = jnp.transpose(wtf, (1, 2, 3, 0)).reshape(Cin, 9 * Cin)
    bu = p["bt"].reshape(Cin, 1).astype(jnp.float32)

    def conv_w_mat(w):                                       # (Co,Ci,3,3) -> (Co, 9*Ci)
        co, ci = w.shape[0], w.shape[1]
        return jnp.transpose(w, (0, 2, 3, 1)).reshape(co, 9 * ci)

    # Eval-mode BN (running_mean=0, running_var=1) folded into weights/bias.
    s1 = p["g1"] / jnp.sqrt(1.0 + _BN_EPS)
    w1m = s1[:, None] * conv_w_mat(p["w1"])
    b1f = (s1 * p["b1"] + p["be1"]).reshape(Cmid, 1)
    s2 = p["g2"] / jnp.sqrt(1.0 + _BN_EPS)
    w2m = s2[:, None] * conv_w_mat(p["w2"])
    b2f = (s2 * p["b2"] + p["be2"]).reshape(Cout, 1)

    # Constant 0/1 scatter matrix: (C, H*W) @ G -> stride-2 zero-stuffed (C, 2H*2W).
    i = jnp.arange(L)
    j = 2 * (i // W) * W2 + 2 * (i % W)
    G = jnp.zeros((L, L2), bf).at[i, j].set(1.0)

    kern = functools.partial(_decoder_kernel, H2=H2, W2=W2)
    out_flat = pl.pallas_call(
        kern,
        out_shape=jax.ShapeDtypeStruct((N, Cout, L2), jnp.float32),
        grid=(N,),
        in_specs=[
            pl.BlockSpec((1, Cin, L), lambda n: (n, 0, 0)),
            pl.BlockSpec((1, Cin, L2), lambda n: (n, 0, 0)),
            pl.BlockSpec((L, L2), lambda n: (0, 0)),
            pl.BlockSpec((Cin, 9 * Cin), lambda n: (0, 0)),
            pl.BlockSpec((Cin, 1), lambda n: (0, 0)),
            pl.BlockSpec((Cmid, 9 * 2 * Cin), lambda n: (0, 0)),
            pl.BlockSpec((Cmid, 1), lambda n: (0, 0)),
            pl.BlockSpec((Cout, 9 * Cmid), lambda n: (0, 0)),
            pl.BlockSpec((Cout, 1), lambda n: (0, 0)),
        ],
        out_specs=pl.BlockSpec((1, Cout, L2), lambda n: (n, 0, 0)),
        compiler_params=pltpu.CompilerParams(
            dimension_semantics=("parallel",)),
    )(x, skip, G, wu.astype(bf), bu, w1m.astype(bf), b1f, w2m.astype(bf), b2f)

    return out_flat.reshape(N, Cout, H2, W2)


# ----------------------------------------------------------------------------
# Parameter init (matches the PyTorch module's shapes)
# ----------------------------------------------------------------------------
def init_params(key, cin, cmid, cout):
    ks = jax.random.split(key, 8)
    p = {}
    p["wt"] = 0.1 * jax.random.normal(ks[0], (cin, cin, 3, 3), jnp.float32)   # ConvTranspose2d
    p["bt"] = 0.1 * jax.random.normal(ks[1], (cin,), jnp.float32)
    p["w1"] = 0.1 * jax.random.normal(ks[2], (cmid, 2 * cin, 3, 3), jnp.float32)
    p["b1"] = 0.1 * jax.random.normal(ks[3], (cmid,), jnp.float32)
    p["g1"] = 1.0 + 0.1 * jax.random.normal(ks[4], (cmid,), jnp.float32)      # BN gamma
    p["be1"] = 0.1 * jax.random.normal(ks[5], (cmid,), jnp.float32)           # BN beta
    p["w2"] = 0.1 * jax.random.normal(ks[6], (cout, cmid, 3, 3), jnp.float32)
    p["b2"] = 0.1 * jax.random.normal(ks[7], (cout,), jnp.float32)
    p["g2"] = jnp.linspace(0.9, 1.1, cout, dtype=jnp.float32)                 # BN gamma
    p["be2"] = jnp.linspace(-0.05, 0.05, cout, dtype=jnp.float32)             # BN beta
    return p


# ----------------------------------------------------------------------------
# Pure-JAX f32 reference (lax convs) for the correctness check
# ----------------------------------------------------------------------------
def _ref_forward(x_nchw, skip_nchw, p):
    dn = ("NHWC", "HWIO", "NHWC")
    x = jnp.transpose(x_nchw, (0, 2, 3, 1))
    skip = jnp.transpose(skip_nchw, (0, 2, 3, 1))
    # ConvTranspose2d as lhs-dilated conv with flipped weights
    w_eq = jnp.transpose(p["wt"][:, :, ::-1, ::-1], (2, 3, 0, 1))  # HWIO
    up = lax.conv_general_dilated(x, w_eq, (1, 1), ((1, 2), (1, 2)),
                                  lhs_dilation=(2, 2), dimension_numbers=dn) + p["bt"]
    cat = jnp.concatenate([up, skip], axis=-1)

    def conv_bn_relu(h, w, b, g, be):
        wk = jnp.transpose(w, (2, 3, 1, 0))  # HWIO
        z = lax.conv_general_dilated(h, wk, (1, 1), ((1, 1), (1, 1)),
                                     dimension_numbers=dn) + b
        z = g / jnp.sqrt(1.0 + _BN_EPS) * z + be
        return jnp.maximum(z, 0.0)

    h1 = conv_bn_relu(cat, p["w1"], p["b1"], p["g1"], p["be1"])
    out = conv_bn_relu(h1, p["w2"], p["b2"], p["g2"], p["be2"])
    return jnp.transpose(out, (0, 3, 1, 2))


if __name__ == "__main__":
    N, Cin, Cmid, Cout = 2, 4, 8, 4
    H = W = 8                           # upsampled to 16x16
    key = jax.random.PRNGKey(0)
    kx, ks, kp = jax.random.split(key, 3)
    x = jax.random.normal(kx, (N, Cin, H, W), jnp.float32)            # NCHW like torch
    skip = jax.random.normal(ks, (N, Cin, 2 * H, 2 * W), jnp.float32) # NCHW like torch
    params = init_params(kp, Cin, Cmid, Cout)

    out = jax.block_until_ready(decoder_block_forward(x, skip, params))
    ref = jax.block_until_ready(_ref_forward(x, skip, params))

    assert out.shape == (N, Cout, 2 * H, 2 * W), out.shape
    # bf16 matmul operands with f32 accumulation vs pure-f32 reference.
    assert jnp.allclose(out, ref, atol=2e-2, rtol=2e-2), float(jnp.max(jnp.abs(out - ref)))
    print("KERNEL_OK")
</pallas_src>

<mosaic_0001>
module attributes {stable_mosaic.version = 11 : i64} {
  func.func @_decoder_kernel(%arg0: i32, %arg1: memref<1x4x64xbf16, #tpu.memory_space<vmem>>, %arg2: memref<1x4x256xbf16, #tpu.memory_space<vmem>>, %arg3: memref<64x256xbf16, #tpu.memory_space<vmem>>, %arg4: memref<4x36xbf16, #tpu.memory_space<vmem>>, %arg5: memref<4x1xf32, #tpu.memory_space<vmem>>, %arg6: memref<8x72xbf16, #tpu.memory_space<vmem>>, %arg7: memref<8x1xf32, #tpu.memory_space<vmem>>, %arg8: memref<4x72xbf16, #tpu.memory_space<vmem>>, %arg9: memref<4x1xf32, #tpu.memory_space<vmem>>, %arg10: memref<1x4x256xf32, #tpu.memory_space<vmem>>) attributes {dimension_semantics = [#tpu.dimension_semantics<parallel>], iteration_bounds = array<i64: 2>, scalar_prefetch = 0 : i64, scratch_operands = 0 : i64, tpu.core_type = #tpu.core_type<tc>, window_params = [{transform_indices = @transform_0, window_bounds = array<i64: 1, 4, 64>}, {transform_indices = @transform_1, window_bounds = array<i64: 1, 4, 256>}, {pipeline_mode = #tpu.pipeline_mode<synchronous>, transform_indices = @transform_2, window_bounds = array<i64: 64, 256>}, {pipeline_mode = #tpu.pipeline_mode<synchronous>, transform_indices = @transform_3, window_bounds = array<i64: 4, 36>}, {pipeline_mode = #tpu.pipeline_mode<synchronous>, transform_indices = @transform_4, window_bounds = array<i64: 4, 1>}, {pipeline_mode = #tpu.pipeline_mode<synchronous>, transform_indices = @transform_5, window_bounds = array<i64: 8, 72>}, {pipeline_mode = #tpu.pipeline_mode<synchronous>, transform_indices = @transform_6, window_bounds = array<i64: 8, 1>}, {pipeline_mode = #tpu.pipeline_mode<synchronous>, transform_indices = @transform_7, window_bounds = array<i64: 4, 72>}, {pipeline_mode = #tpu.pipeline_mode<synchronous>, transform_indices = @transform_8, window_bounds = array<i64: 4, 1>}, {transform_indices = @transform_9, window_bounds = array<i64: 1, 4, 256>}]} {
    %0 = tpu.iota {dimensions = array<i32: 1>} : vector<1x256xi32>
    %c16_i32 = arith.constant 16 : i32
    %c0_i32 = arith.constant 0 : i32
    %1 = arith.cmpi eq, %c16_i32, %c0_i32 : i32
    %c1_i32 = arith.constant 1 : i32
    %2 = arith.select %1, %c1_i32, %c16_i32 : i32
    %3 = vector.broadcast %2 : i32 to vector<1x256xi32>
    %4 = arith.remsi %0, %3 : vector<1x256xi32>
    %c0_i32_0 = arith.constant 0 : i32
    %5 = vector.broadcast %c0_i32_0 : i32 to vector<1x256xi32>
    %6 = arith.cmpi ne, %4, %5 : vector<1x256xi32>
    %c0_i32_1 = arith.constant 0 : i32
    %7 = vector.broadcast %c0_i32_1 : i32 to vector<1x256xi32>
    %8 = arith.cmpi slt, %4, %7 : vector<1x256xi32>
    %c0_i32_2 = arith.constant 0 : i32
    %9 = arith.cmpi slt, %2, %c0_i32_2 : i32
    %10 = vector.broadcast %9 : i1 to vector<1x256xi1>
    %11 = vector.broadcast %10 : vector<1x256xi1> to vector<1x256xi1>
    %12 = arith.xori %8, %11 : vector<1x256xi1>
    %13 = arith.andi %12, %6 : vector<1x256xi1>
    %14 = vector.broadcast %2 : i32 to vector<1x256xi32>
    %15 = arith.addi %4, %14 : vector<1x256xi32>
    %16 = arith.select %13, %15, %4 : vector<1x256xi1>, vector<1x256xi32>
    %c1_i32_3 = arith.constant 1 : i32
    %17 = vector.broadcast %c1_i32_3 : i32 to vector<1x256xi32>
    %18 = arith.cmpi sge, %16, %17 : vector<1x256xi32>
    %c15_i32 = arith.constant 15 : i32
    %19 = vector.broadcast %c15_i32 : i32 to vector<1x256xi32>
    %20 = arith.cmpi slt, %16, %19 : vector<1x256xi32>
    %c0 = arith.constant 0 : index
    %c0_4 = arith.constant 0 : index
    %c0_5 = arith.constant 0 : index
    %21 = vector.load %arg1[%c0, %c0_4, %c0_5] : memref<1x4x64xbf16, #tpu.memory_space<vmem>>, vector<1x4x64xbf16>
    %22 = vector.shape_cast %21 : vector<1x4x64xbf16> to vector<4x64xbf16>
    %c0_6 = arith.constant 0 : index
    %c0_7 = arith.constant 0 : index
    %23 = vector.load %arg3[%c0_6, %c0_7] : memref<64x256xbf16, #tpu.memory_space<vmem>>, vector<64x256xbf16>
    %cst = arith.constant dense<0.000000e+00> : vector<4x256xf32>
    %24 = tpu.matmul %22, %23, %cst {dimension_numbers = #tpu.dot_dimension_numbers<[1], [0], [0], [1], [0, 0, 1, 1], [], []>} : vector<4x64xbf16>, vector<64x256xbf16>, vector<4x256xf32> -> vector<4x256xf32>
    %c0_8 = arith.constant 0 : index
    %c0_9 = arith.constant 0 : index
    %25 = vector.load %arg4[%c0_8, %c0_9] : memref<4x36xbf16, #tpu.memory_space<vmem>>, vector<4x36xbf16>
    %c0_10 = arith.constant 0 : index
    %c0_11 = arith.constant 0 : index
    %26 = vector.load %arg5[%c0_10, %c0_11] : memref<4x1xf32, #tpu.memory_space<vmem>>, vector<4x1xf32>
    %27 = arith.truncf %24 : vector<4x256xf32> to vector<4x256xbf16>
    %cst_12 = arith.constant 0.000000e+00 : bf16
    %28 = vector.broadcast %cst_12 : bf16 to vector<4x17xbf16>
    %29 = tpu.concatenate %28, %27, %28 in 1 : vector<4x17xbf16>, vector<4x256xbf16>, vector<4x17xbf16> -> vector<4x290xbf16>
    %30 = vector.extract_strided_slice %29 {offsets = [0, 0], sizes = [4, 256], strides = [1, 1]} : vector<4x290xbf16> to vector<4x256xbf16>
    %cst_13 = arith.constant 0.000000e+00 : bf16
    %31 = vector.broadcast %cst_13 : bf16 to vector<4x256xbf16>
    %32 = vector.shape_cast %18 : vector<1x256xi1> to vector<1x256xi1>
    %33 = vector.broadcast %32 : vector<1x256xi1> to vector<4x256xi1>
    %34 = arith.select %33, %30, %31 : vector<4x256xi1>, vector<4x256xbf16>
    %35 = vector.extract_strided_slice %29 {offsets = [0, 1], sizes = [4, 256], strides = [1, 1]} : vector<4x290xbf16> to vector<4x256xbf16>
    %36 = vector.extract_strided_slice %29 {offsets = [0, 2], sizes = [4, 256], strides = [1, 1]} : vector<4x290xbf16> to vector<4x256xbf16>
    %cst_14 = arith.constant 0.000000e+00 : bf16
    %37 = vector.broadcast %cst_14 : bf16 to vector<4x256xbf16>
    %38 = vector.shape_cast %20 : vector<1x256xi1> to vector<1x256xi1>
    %39 = vector.broadcast %38 : vector<1x256xi1> to vector<4x256xi1>
    %40 = arith.select %39, %36, %37 : vector<4x256xi1>, vector<4x256xbf16>
    %41 = vector.extract_strided_slice %29 {offsets = [0, 16], sizes = [4, 256], strides = [1, 1]} : vector<4x290xbf16> to vector<4x256xbf16>
    %cst_15 = arith.constant 0.000000e+00 : bf16
    %42 = vector.broadcast %cst_15 : bf16 to vector<4x256xbf16>
    %43 = vector.shape_cast %18 : vector<1x256xi1> to vector<1x256xi1>
    %44 = vector.broadcast %43 : vector<1x256xi1> to vector<4x256xi1>
    %45 = arith.select %44, %41, %42 : vector<4x256xi1>, vector<4x256xbf16>
    %46 = vector.extract_strided_slice %29 {offsets = [0, 17], sizes = [4, 256], strides = [1, 1]} : vector<4x290xbf16> to vector<4x256xbf16>
    %47 = vector.extract_strided_slice %29 {offsets = [0, 18], sizes = [4, 256], strides = [1, 1]} : vector<4x290xbf16> to vector<4x256xbf16>
    %cst_16 = arith.constant 0.000000e+00 : bf16
    %48 = vector.broadcast %cst_16 : bf16 to vector<4x256xbf16>
    %49 = vector.shape_cast %20 : vector<1x256xi1> to vector<1x256xi1>
    %50 = vector.broadcast %49 : vector<1x256xi1> to vector<4x256xi1>
    %51 = arith.select %50, %47, %48 : vector<4x256xi1>, vector<4x256xbf16>
    %52 = vector.extract_strided_slice %29 {offsets = [0, 32], sizes = [4, 256], strides = [1, 1]} : vector<4x290xbf16> to vector<4x256xbf16>
    %cst_17 = arith.constant 0.000000e+00 : bf16
    %53 = vector.broadcast %cst_17 : bf16 to vector<4x256xbf16>
    %54 = vector.shape_cast %18 : vector<1x256xi1> to vector<1x256xi1>
    %55 = vector.broadcast %54 : vector<1x256xi1> to vector<4x256xi1>
    %56 = arith.select %55, %52, %53 : vector<4x256xi1>, vector<4x256xbf16>
    %57 = vector.extract_strided_slice %29 {offsets = [0, 33], sizes = [4, 256], strides = [1, 1]} : vector<4x290xbf16> to vector<4x256xbf16>
    %58 = vector.extract_strided_slice %29 {offsets = [0, 34], sizes = [4, 256], strides = [1, 1]} : vector<4x290xbf16> to vector<4x256xbf16>
    %cst_18 = arith.constant 0.000000e+00 : bf16
    %59 = vector.broadcast %cst_18 : bf16 to vector<4x256xbf16>
    %60 = vector.shape_cast %20 : vector<1x256xi1> to vector<1x256xi1>
    %61 = vector.broadcast %60 : vector<1x256xi1> to vector<4x256xi1>
    %62 = arith.select %61, %58, %59 : vector<4x256xi1>, vector<4x256xbf16>
    %63 = tpu.concatenate %34, %35, %40, %45, %46, %51, %56, %57, %62 in 0 : vector<4x256xbf16>, vector<4x256xbf16>, vector<4x256xbf16>, vector<4x256xbf16>, vector<4x256xbf16>, vector<4x256xbf16>, vector<4x256xbf16>, vector<4x256xbf16>, vector<4x256xbf16> -> vector<36x256xbf16>
    %cst_19 = arith.constant dense<0.000000e+00> : vector<4x256xf32>
    %64 = tpu.matmul %25, %63, %cst_19 {dimension_numbers = #tpu.dot_dimension_numbers<[1], [0], [0], [1], [0, 0, 1, 1], [], []>} : vector<4x36xbf16>, vector<36x256xbf16>, vector<4x256xf32> -> vector<4x256xf32>
    %65 = vector.broadcast %26 : vector<4x1xf32> to vector<4x256xf32>
    %66 = arith.addf %64, %65 : vector<4x256xf32>
    %67 = arith.truncf %66 : vector<4x256xf32> to vector<4x256xbf16>
    %c0_20 = arith.constant 0 : index
    %c0_21 = arith.constant 0 : index
    %c0_22 = arith.constant 0 : index
    %68 = vector.load %arg2[%c0_20, %c0_21, %c0_22] : memref<1x4x256xbf16, #tpu.memory_space<vmem>>, vector<1x4x256xbf16>
    %69 = vector.shape_cast %68 : vector<1x4x256xbf16> to vector<4x256xbf16>
    %70 = tpu.concatenate %67, %69 in 0 : vector<4x256xbf16>, vector<4x256xbf16> -> vector<8x256xbf16>
    %c0_23 = arith.constant 0 : index
    %c0_24 = arith.constant 0 : index
    %71 = vector.load %arg6[%c0_23, %c0_24] : memref<8x72xbf16, #tpu.memory_space<vmem>>, vector<8x72xbf16>
    %c0_25 = arith.constant 0 : index
    %c0_26 = arith.constant 0 : index
    %72 = vector.load %arg7[%c0_25, %c0_26] : memref<8x1xf32, #tpu.memory_space<vmem>>, vector<8x1xf32>
    %cst_27 = arith.constant 0.000000e+00 : bf16
    %73 = vector.broadcast %cst_27 : bf16 to vector<8x17xbf16>
    %74 = tpu.concatenate %73, %70, %73 in 1 : vector<8x17xbf16>, vector<8x256xbf16>, vector<8x17xbf16> -> vector<8x290xbf16>
    %75 = vector.extract_strided_slice %74 {offsets = [0, 0], sizes = [8, 256], strides = [1, 1]} : vector<8x290xbf16> to vector<8x256xbf16>
    %cst_28 = arith.constant 0.000000e+00 : bf16
    %76 = vector.broadcast %cst_28 : bf16 to vector<8x256xbf16>
    %77 = vector.shape_cast %18 : vector<1x256xi1> to vector<1x256xi1>
    %78 = vector.broadcast %77 : vector<1x256xi1> to vector<8x256xi1>
    %79 = arith.select %78, %75, %76 : vector<8x256xi1>, vector<8x256xbf16>
    %80 = vector.extract_strided_slice %74 {offsets = [0, 1], sizes = [8, 256], strides = [1, 1]} : vector<8x290xbf16> to vector<8x256xbf16>
    %81 = vector.extract_strided_slice %74 {offsets = [0, 2], sizes = [8, 256], strides = [1, 1]} : vector<8x290xbf16> to vector<8x256xbf16>
    %cst_29 = arith.constant 0.000000e+00 : bf16
    %82 = vector.broadcast %cst_29 : bf16 to vector<8x256xbf16>
    %83 = vector.shape_cast %20 : vector<1x256xi1> to vector<1x256xi1>
    %84 = vector.broadcast %83 : vector<1x256xi1> to vector<8x256xi1>
    %85 = arith.select %84, %81, %82 : vector<8x256xi1>, vector<8x256xbf16>
    %86 = vector.extract_strided_slice %74 {offsets = [0, 16], sizes = [8, 256], strides = [1, 1]} : vector<8x290xbf16> to vector<8x256xbf16>
    %cst_30 = arith.constant 0.000000e+00 : bf16
    %87 = vector.broadcast %cst_30 : bf16 to vector<8x256xbf16>
    %88 = vector.shape_cast %18 : vector<1x256xi1> to vector<1x256xi1>
    %89 = vector.broadcast %88 : vector<1x256xi1> to vector<8x256xi1>
    %90 = arith.select %89, %86, %87 : vector<8x256xi1>, vector<8x256xbf16>
    %91 = vector.extract_strided_slice %74 {offsets = [0, 17], sizes = [8, 256], strides = [1, 1]} : vector<8x290xbf16> to vector<8x256xbf16>
    %92 = vector.extract_strided_slice %74 {offsets = [0, 18], sizes = [8, 256], strides = [1, 1]} : vector<8x290xbf16> to vector<8x256xbf16>
    %cst_31 = arith.constant 0.000000e+00 : bf16
    %93 = vector.broadcast %cst_31 : bf16 to vector<8x256xbf16>
    %94 = vector.shape_cast %20 : vector<1x256xi1> to vector<1x256xi1>
    %95 = vector.broadcast %94 : vector<1x256xi1> to vector<8x256xi1>
    %96 = arith.select %95, %92, %93 : vector<8x256xi1>, vector<8x256xbf16>
    %97 = vector.extract_strided_slice %74 {offsets = [0, 32], sizes = [8, 256], strides = [1, 1]} : vector<8x290xbf16> to vector<8x256xbf16>
    %cst_32 = arith.constant 0.000000e+00 : bf16
    %98 = vector.broadcast %cst_32 : bf16 to vector<8x256xbf16>
    %99 = vector.shape_cast %18 : vector<1x256xi1> to vector<1x256xi1>
    %100 = vector.broadcast %99 : vector<1x256xi1> to vector<8x256xi1>
    %101 = arith.select %100, %97, %98 : vector<8x256xi1>, vector<8x256xbf16>
    %102 = vector.extract_strided_slice %74 {offsets = [0, 33], sizes = [8, 256], strides = [1, 1]} : vector<8x290xbf16> to vector<8x256xbf16>
    %103 = vector.extract_strided_slice %74 {offsets = [0, 34], sizes = [8, 256], strides = [1, 1]} : vector<8x290xbf16> to vector<8x256xbf16>
    %cst_33 = arith.constant 0.000000e+00 : bf16
    %104 = vector.broadcast %cst_33 : bf16 to vector<8x256xbf16>
    %105 = vector.shape_cast %20 : vector<1x256xi1> to vector<1x256xi1>
    %106 = vector.broadcast %105 : vector<1x256xi1> to vector<8x256xi1>
    %107 = arith.select %106, %103, %104 : vector<8x256xi1>, vector<8x256xbf16>
    %108 = tpu.concatenate %79, %80, %85, %90, %91, %96, %101, %102, %107 in 0 : vector<8x256xbf16>, vector<8x256xbf16>, vector<8x256xbf16>, vector<8x256xbf16>, vector<8x256xbf16>, vector<8x256xbf16>, vector<8x256xbf16>, vector<8x256xbf16>, vector<8x256xbf16> -> vector<72x256xbf16>
    %cst_34 = arith.constant dense<0.000000e+00> : vector<8x256xf32>
    %109 = tpu.matmul %71, %108, %cst_34 {dimension_numbers = #tpu.dot_dimension_numbers<[1], [0], [0], [1], [0, 0, 1, 1], [], []>} : vector<8x72xbf16>, vector<72x256xbf16>, vector<8x256xf32> -> vector<8x256xf32>
    %110 = vector.broadcast %72 : vector<8x1xf32> to vector<8x256xf32>
    %111 = arith.addf %109, %110 : vector<8x256xf32>
    %cst_35 = arith.constant 0.000000e+00 : f32
    %112 = vector.broadcast %cst_35 : f32 to vector<8x256xf32>
    %113 = arith.maximumf %111, %112 : vector<8x256xf32>
    %c0_36 = arith.constant 0 : index
    %c0_37 = arith.constant 0 : index
    %114 = vector.load %arg8[%c0_36, %c0_37] : memref<4x72xbf16, #tpu.memory_space<vmem>>, vector<4x72xbf16>
    %c0_38 = arith.constant 0 : index
    %c0_39 = arith.constant 0 : index
    %115 = vector.load %arg9[%c0_38, %c0_39] : memref<4x1xf32, #tpu.memory_space<vmem>>, vector<4x1xf32>
    %116 = arith.truncf %113 : vector<8x256xf32> to vector<8x256xbf16>
    %cst_40 = arith.constant 0.000000e+00 : bf16
    %117 = vector.broadcast %cst_40 : bf16 to vector<8x17xbf16>
    %118 = tpu.concatenate %117, %116, %117 in 1 : vector<8x17xbf16>, vector<8x256xbf16>, vector<8x17xbf16> -> vector<8x290xbf16>
    %119 = vector.extract_strided_slice %118 {offsets = [0, 0], sizes = [8, 256], strides = [1, 1]} : vector<8x290xbf16> to vector<8x256xbf16>
    %cst_41 = arith.constant 0.000000e+00 : bf16
    %120 = vector.broadcast %cst_41 : bf16 to vector<8x256xbf16>
    %121 = vector.shape_cast %18 : vector<1x256xi1> to vector<1x256xi1>
    %122 = vector.broadcast %121 : vector<1x256xi1> to vector<8x256xi1>
    %123 = arith.select %122, %119, %120 : vector<8x256xi1>, vector<8x256xbf16>
    %124 = vector.extract_strided_slice %118 {offsets = [0, 1], sizes = [8, 256], strides = [1, 1]} : vector<8x290xbf16> to vector<8x256xbf16>
    %125 = vector.extract_strided_slice %118 {offsets = [0, 2], sizes = [8, 256], strides = [1, 1]} : vector<8x290xbf16> to vector<8x256xbf16>
    %cst_42 = arith.constant 0.000000e+00 : bf16
    %126 = vector.broadcast %cst_42 : bf16 to vector<8x256xbf16>
    %127 = vector.shape_cast %20 : vector<1x256xi1> to vector<1x256xi1>
    %128 = vector.broadcast %127 : vector<1x256xi1> to vector<8x256xi1>
    %129 = arith.select %128, %125, %126 : vector<8x256xi1>, vector<8x256xbf16>
    %130 = vector.extract_strided_slice %118 {offsets = [0, 16], sizes = [8, 256], strides = [1, 1]} : vector<8x290xbf16> to vector<8x256xbf16>
    %cst_43 = arith.constant 0.000000e+00 : bf16
    %131 = vector.broadcast %cst_43 : bf16 to vector<8x256xbf16>
    %132 = vector.shape_cast %18 : vector<1x256xi1> to vector<1x256xi1>
    %133 = vector.broadcast %132 : vector<1x256xi1> to vector<8x256xi1>
    %134 = arith.select %133, %130, %131 : vector<8x256xi1>, vector<8x256xbf16>
    %135 = vector.extract_strided_slice %118 {offsets = [0, 17], sizes = [8, 256], strides = [1, 1]} : vector<8x290xbf16> to vector<8x256xbf16>
    %136 = vector.extract_strided_slice %118 {offsets = [0, 18], sizes = [8, 256], strides = [1, 1]} : vector<8x290xbf16> to vector<8x256xbf16>
    %cst_44 = arith.constant 0.000000e+00 : bf16
    %137 = vector.broadcast %cst_44 : bf16 to vector<8x256xbf16>
    %138 = vector.shape_cast %20 : vector<1x256xi1> to vector<1x256xi1>
    %139 = vector.broadcast %138 : vector<1x256xi1> to vector<8x256xi1>
    %140 = arith.select %139, %136, %137 : vector<8x256xi1>, vector<8x256xbf16>
    %141 = vector.extract_strided_slice %118 {offsets = [0, 32], sizes = [8, 256], strides = [1, 1]} : vector<8x290xbf16> to vector<8x256xbf16>
    %cst_45 = arith.constant 0.000000e+00 : bf16
    %142 = vector.broadcast %cst_45 : bf16 to vector<8x256xbf16>
    %143 = vector.shape_cast %18 : vector<1x256xi1> to vector<1x256xi1>
    %144 = vector.broadcast %143 : vector<1x256xi1> to vector<8x256xi1>
    %145 = arith.select %144, %141, %142 : vector<8x256xi1>, vector<8x256xbf16>
    %146 = vector.extract_strided_slice %118 {offsets = [0, 33], sizes = [8, 256], strides = [1, 1]} : vector<8x290xbf16> to vector<8x256xbf16>
    %147 = vector.extract_strided_slice %118 {offsets = [0, 34], sizes = [8, 256], strides = [1, 1]} : vector<8x290xbf16> to vector<8x256xbf16>
    %cst_46 = arith.constant 0.000000e+00 : bf16
    %148 = vector.broadcast %cst_46 : bf16 to vector<8x256xbf16>
    %149 = vector.shape_cast %20 : vector<1x256xi1> to vector<1x256xi1>
    %150 = vector.broadcast %149 : vector<1x256xi1> to vector<8x256xi1>
    %151 = arith.select %150, %147, %148 : vector<8x256xi1>, vector<8x256xbf16>
    %152 = tpu.concatenate %123, %124, %129, %134, %135, %140, %145, %146, %151 in 0 : vector<8x256xbf16>, vector<8x256xbf16>, vector<8x256xbf16>, vector<8x256xbf16>, vector<8x256xbf16>, vector<8x256xbf16>, vector<8x256xbf16>, vector<8x256xbf16>, vector<8x256xbf16> -> vector<72x256xbf16>
    %cst_47 = arith.constant dense<0.000000e+00> : vector<4x256xf32>
    %153 = tpu.matmul %114, %152, %cst_47 {dimension_numbers = #tpu.dot_dimension_numbers<[1], [0], [0], [1], [0, 0, 1, 1], [], []>} : vector<4x72xbf16>, vector<72x256xbf16>, vector<4x256xf32> -> vector<4x256xf32>
    %154 = vector.broadcast %115 : vector<4x1xf32> to vector<4x256xf32>
    %155 = arith.addf %153, %154 : vector<4x256xf32>
    %cst_48 = arith.constant 0.000000e+00 : f32
    %156 = vector.broadcast %cst_48 : f32 to vector<4x256xf32>
    %157 = arith.maximumf %155, %156 : vector<4x256xf32>
    %c0_49 = arith.constant 0 : index
    %c0_50 = arith.constant 0 : index
    %c0_51 = arith.constant 0 : index
    %158 = vector.load %arg10[%c0_49, %c0_50, %c0_51] : memref<1x4x256xf32, #tpu.memory_space<vmem>>, vector<1x4x256xf32>
    %159 = vector.shape_cast %158 : vector<1x4x256xf32> to vector<4x256xf32>
    %160 = vector.shape_cast %157 : vector<4x256xf32> to vector<1x4x256xf32>
    tpu.vector_store %arg10[%c0_49, %c0_50, %c0_51], %160 {strides = array<i32>} : memref<1x4x256xf32, #tpu.memory_space<vmem>>, vector<1x4x256xf32>,
    return
  }
  func.func @transform_0(%arg0: i32) -> (i32, i32, i32) {
    %c0_i32 = arith.constant 0 : i32
    %c0_i32_0 = arith.constant 0 : i32
    %c0_i32_1 = arith.constant 0 : i32
    return %arg0, %c0_i32, %c0_i32_0 : i32, i32, i32
  }
  func.func @transform_1(%arg0: i32) -> (i32, i32, i32) {
    %c0_i32 = arith.constant 0 : i32
    %c0_i32_0 = arith.constant 0 : i32
    %c0_i32_1 = arith.constant 0 : i32
    return %arg0, %c0_i32, %c0_i32_0 : i32, i32, i32
  }
  func.func @transform_2(%arg0: i32) -> (i32, i32) {
    %c0_i32 = arith.constant 0 : i32
    %c0_i32_0 = arith.constant 0 : i32
    %c0_i32_1 = arith.constant 0 : i32
    return %c0_i32, %c0_i32_0 : i32, i32
  }
  func.func @transform_3(%arg0: i32) -> (i32, i32) {
    %c0_i32 = arith.constant 0 : i32
    %c0_i32_0 = arith.constant 0 : i32
    %c0_i32_1 = arith.constant 0 : i32
    return %c0_i32, %c0_i32_0 : i32, i32
  }
  func.func @transform_4(%arg0: i32) -> (i32, i32) {
    %c0_i32 = arith.constant 0 : i32
    %c0_i32_0 = arith.constant 0 : i32
    %c0_i32_1 = arith.constant 0 : i32
    return %c0_i32, %c0_i32_0 : i32, i32
  }
  func.func @transform_5(%arg0: i32) -> (i32, i32) {
    %c0_i32 = arith.constant 0 : i32
    %c0_i32_0 = arith.constant 0 : i32
    %c0_i32_1 = arith.constant 0 : i32
    return %c0_i32, %c0_i32_0 : i32, i32
  }
  func.func @transform_6(%arg0: i32) -> (i32, i32) {
    %c0_i32 = arith.constant 0 : i32
    %c0_i32_0 = arith.constant 0 : i32
    %c0_i32_1 = arith.constant 0 : i32
    return %c0_i32, %c0_i32_0 : i32, i32
  }
  func.func @transform_7(%arg0: i32) -> (i32, i32) {
    %c0_i32 = arith.constant 0 : i32
    %c0_i32_0 = arith.constant 0 : i32
    %c0_i32_1 = arith.constant 0 : i32
    return %c0_i32, %c0_i32_0 : i32, i32
  }
  func.func @transform_8(%arg0: i32) -> (i32, i32) {
    %c0_i32 = arith.constant 0 : i32
    %c0_i32_0 = arith.constant 0 : i32
    %c0_i32_1 = arith.constant 0 : i32
    return %c0_i32, %c0_i32_0 : i32, i32
  }
  func.func @transform_9(%arg0: i32) -> (i32, i32, i32) {
    %c0_i32 = arith.constant 0 : i32
    %c0_i32_0 = arith.constant 0 : i32
    %c0_i32_1 = arith.constant 0 : i32
    return %arg0, %c0_i32, %c0_i32_0 : i32, i32, i32
  }
}

</mosaic_0001>

<llo_original>
// kernel: tpu_custom_call.1
$region0: #{tpu_custom_call.1}
  #allocation0 [shape = 'u32[]', space=smem, size = 0x4, offset = 0x4, fixed_abs, tag = 'smem constant byte address 0x4 - core index']
  #allocation1 [shape = 'u32[144,128]{1,0:T(1,128)}', space=vmem, size = 0x12000, scoped, tag = 'internal scratch']
  %s0 = inlined_call_operand.vmem [shape: bf16[2,4,64], index: 0, kind: input, shape index: {}]
  %s1 = inlined_call_operand.vmem [shape: bf16[2,4,256], index: 1, kind: input, shape index: {}]
  %s2 = inlined_call_operand.hbm [shape: bf16[64,256], index: 2, kind: input, shape index: {}]
  %s3 = inlined_call_operand.vmem [shape: bf16[4,36], index: 3, kind: input, shape index: {}]
  %s4 = inlined_call_operand.vmem [shape: f32[4,1], index: 4, kind: input, shape index: {}]
  %s5 = inlined_call_operand.vmem [shape: bf16[8,72], index: 5, kind: input, shape index: {}]
  %s6 = inlined_call_operand.vmem [shape: f32[8,1], index: 6, kind: input, shape index: {}]
  %s7 = inlined_call_operand.vmem [shape: bf16[4,72], index: 7, kind: input, shape index: {}]
  %s8 = inlined_call_operand.vmem [shape: f32[4,1], index: 8, kind: input, shape index: {}]
  %s9 = inlined_call_operand.hbm [shape: f32[2,4,256], index: 9, kind: output, shape index: {}]
  %s10 = sld [smem:[#allocation0]]
  $region73: #{tpu_custom_call.1} parent=0
    _
  %s12 = ssub.s32 1, %s10
  %s13 = scalar_select 0, %s12, %s10
  $region1: #{tpu_custom_call.1} parent=0
    #allocation2 [shape = 'u8[32768]{0}', space=vmem, size = 0x8000, scoped, tag = 'input window, operand 2, single buffered']
    #allocation3 [shape = 's32[2]{0}', space=sflag, size = 0x8, scoped, tag = 'scoped memory for tpu_custom_call.1']
    #allocation4 [shape = 's32[2]{0}', space=sflag, size = 0x8, scoped, tag = 'scoped memory for tpu_custom_call.1']
    #allocation5 [shape = 'u8[8192]{0}', space=vmem, size = 0x2000, scoped, tag = 'output window, operand 0']
    %14 = vsyncpa [#allocation3], 0
    %15 = vsyncpa [#allocation4], 0
    %s16 = scalar_lea.sflag [#allocation4], 1
    %17 = vsyncpa %s16, 0
    loop: start=0, step=1, limit=4
    $region2: #{tpu_custom_call.1} parent=1 // loop_pre_header
      _
    $region3: #{tpu_custom_call.1} parent=1 // loop_header
      %s19 = sphi 0, %s23
      %p20 = scmp.ge.s32.totalorder %s19, 4
      %s29 = sphi 0, %s31
      %s32 = sphi 0, %s29
      %s33 = sphi 0, %s32
      %s49 = sphi 0, %s33
      %s55 = sphi 0, %s57
      %s58 = sphi 0, %s55
      %s59 = sphi 0, %s58
      %s75 = sphi 0, %s59
      %s79 = sphi 0, %s79
      %s81 = sphi 0, %s79
      %s82 = sphi 0, %s81
      %s96 = sphi 0, %s82
      %s100 = sphi 0, %s100
      %s102 = sphi 0, %s100
      %s103 = sphi 0, %s102
      %s117 = sphi 0, %s103
      %s121 = sphi 0, %s121
      %s123 = sphi 0, %s121
      %s124 = sphi 0, %s123
      %s138 = sphi 0, %s124
      %s142 = sphi 0, %s142
      %s144 = sphi 0, %s142
      %s145 = sphi 0, %s144
      %s159 = sphi 0, %s145
      %s163 = sphi 0, %s163
      %s165 = sphi 0, %s163
      %s166 = sphi 0, %s165
      %s180 = sphi 0, %s166
      %s184 = sphi 0, %s184
      %s186 = sphi 0, %s184
      %s187 = sphi 0, %s186
      %s201 = sphi 0, %s187
      %s205 = sphi 0, %s205
      %s207 = sphi 0, %s205
      %s208 = sphi 0, %s207
      %s222 = sphi 0, %s208
      %s228 = sphi 0, %s230
      %s231 = sphi 0, %s228
      %s232 = sphi 0, %s231
      %s248 = sphi 0, %s232
    $region4: #{tpu_custom_call.1} parent=1 // loop_header_branch
      %22 = sbr.rel (%p20) target = $region8
    $region5: #{tpu_custom_call.1} parent=1 // loop_body
      %s24 = ssub.s32 %s19, 1
      %s25 = ssub.s32 %s19, 2
      %s26 = sadd.s32 %s19, 1
      %s27 = ssub.s32 %s19, %s26
      %p28 = scmp.eq.s32.totalorder %s27, 0
      %s30 = sadd.s32 %s29, 1
      %s31 = scalar_select %p28, %s29, %s30
      %p34 = pneg %p28
      %p35 = scmp.eq.s32.totalorder %s19, 1
      %p36 = por %p34, %p35
      %p37 = scmp.ne.s32.totalorder %s29, %s32
      %p38 = scmp.eq.s32.totalorder %s19, 0
      %p39 = por %p37, %p38
      %p40 = scmp.ne.s32.totalorder %s29, %s32
      %p41 = scmp.eq.s32.totalorder %s24, 1
      %p42 = por %p40, %p41
      %p43 = scmp.ne.s32.totalorder %s32, %s33
      %p44 = scmp.eq.s32.totalorder %s24, 0
      %p45 = por %p43, %p44
      %p46 = scmp.ne.s32.totalorder %s32, %s33
      %p47 = scmp.eq.s32.totalorder %s25, 1
      %p48 = por %p46, %p47
      %p50 = scmp.ne.s32.totalorder %s33, %s49
      %p51 = scmp.eq.s32.totalorder %s25, 0
      %p52 = por %p50, %p51
      %s53 = ssub.s32 %s19, %s26
      %p54 = scmp.eq.s32.totalorder %s53, 0
      %s56 = sadd.s32 %s55, 1
      %s57 = scalar_select %p54, %s55, %s56
      %p60 = pneg %p54
      %p61 = scmp.eq.s32.totalorder %s19, 1
      %p62 = por %p60, %p61
      %p63 = scmp.ne.s32.totalorder %s55, %s58
      %p64 = scmp.eq.s32.totalorder %s19, 0
      %p65 = por %p63, %p64
      %p66 = scmp.ne.s32.totalorder %s55, %s58
      %p67 = scmp.eq.s32.totalorder %s24, 1
      %p68 = por %p66, %p67
      %p69 = scmp.ne.s32.totalorder %s58, %s59
      %p70 = scmp.eq.s32.totalorder %s24, 0
      %p71 = por %p69, %p70
      %p72 = scmp.ne.s32.totalorder %s58, %s59
      %p73 = scmp.eq.s32.totalorder %s25, 1
      %p74 = por %p72, %p73
      %p76 = scmp.ne.s32.totalorder %s59, %s75
      %p77 = scmp.eq.s32.totalorder %s25, 0
      %p78 = por %p76, %p77
      %s80 = sadd.s32 %s79, 1
      %p83 = scmp.eq.s32.totalorder %s19, 1
      %p84 = scmp.ne.s32.totalorder %s79, %s81
      %p85 = scmp.eq.s32.totalorder %s19, 0
      %p86 = por %p84, %p85
      %p87 = scmp.ne.s32.totalorder %s79, %s81
      %p88 = scmp.eq.s32.totalorder %s24, 1
      %p89 = por %p87, %p88
      %p90 = scmp.ne.s32.totalorder %s81, %s82
      %p91 = scmp.eq.s32.totalorder %s24, 0
      %p92 = por %p90, %p91
      %p93 = scmp.ne.s32.totalorder %s81, %s82
      %p94 = scmp.eq.s32.totalorder %s25, 1
      %p95 = por %p93, %p94
      %p97 = scmp.ne.s32.totalorder %s82, %s96
      %p98 = scmp.eq.s32.totalorder %s25, 0
      %p99 = por %p97, %p98
      %s101 = sadd.s32 %s100, 1
      %p104 = scmp.eq.s32.totalorder %s19, 1
      %p105 = scmp.ne.s32.totalorder %s100, %s102
      %p106 = scmp.eq.s32.totalorder %s19, 0
      %p107 = por %p105, %p106
      %p108 = scmp.ne.s32.totalorder %s100, %s102
      %p109 = scmp.eq.s32.totalorder %s24, 1
      %p110 = por %p108, %p109
      %p111 = scmp.ne.s32.totalorder %s102, %s103
      %p112 = scmp.eq.s32.totalorder %s24, 0
      %p113 = por %p111, %p112
      %p114 = scmp.ne.s32.totalorder %s102, %s103
      %p115 = scmp.eq.s32.totalorder %s25, 1
      %p116 = por %p114, %p115
      %p118 = scmp.ne.s32.totalorder %s103, %s117
      %p119 = scmp.eq.s32.totalorder %s25, 0
      %p120 = por %p118, %p119
      %s122 = sadd.s32 %s121, 1
      %p125 = scmp.eq.s32.totalorder %s19, 1
      %p126 = scmp.ne.s32.totalorder %s121, %s123
      %p127 = scmp.eq.s32.totalorder %s19, 0
      %p128 = por %p126, %p127
      %p129 = scmp.ne.s32.totalorder %s121, %s123
      %p130 = scmp.eq.s32.totalorder %s24, 1
      %p131 = por %p129, %p130
      %p132 = scmp.ne.s32.totalorder %s123, %s124
      %p133 = scmp.eq.s32.totalorder %s24, 0
      %p134 = por %p132, %p133
      %p135 = scmp.ne.s32.totalorder %s123, %s124
      %p136 = scmp.eq.s32.totalorder %s25, 1
      %p137 = por %p135, %p136
      %p139 = scmp.ne.s32.totalorder %s124, %s138
      %p140 = scmp.eq.s32.totalorder %s25, 0
      %p141 = por %p139, %p140
      %s143 = sadd.s32 %s142, 1
      %p146 = scmp.eq.s32.totalorder %s19, 1
      %p147 = scmp.ne.s32.totalorder %s142, %s144
      %p148 = scmp.eq.s32.totalorder %s19, 0
      %p149 = por %p147, %p148
      %p150 = scmp.ne.s32.totalorder %s142, %s144
      %p151 = scmp.eq.s32.totalorder %s24, 1
      %p152 = por %p150, %p151
      %p153 = scmp.ne.s32.totalorder %s144, %s145
      %p154 = scmp.eq.s32.totalorder %s24, 0
      %p155 = por %p153, %p154
      %p156 = scmp.ne.s32.totalorder %s144, %s145
      %p157 = scmp.eq.s32.totalorder %s25, 1
      %p158 = por %p156, %p157
      %p160 = scmp.ne.s32.totalorder %s145, %s159
      %p161 = scmp.eq.s32.totalorder %s25, 0
      %p162 = por %p160, %p161
      %s164 = sadd.s32 %s163, 1
      %p167 = scmp.eq.s32.totalorder %s19, 1
      %p168 = scmp.ne.s32.totalorder %s163, %s165
      %p169 = scmp.eq.s32.totalorder %s19, 0
      %p170 = por %p168, %p169
      %p171 = scmp.ne.s32.totalorder %s163, %s165
      %p172 = scmp.eq.s32.totalorder %s24, 1
      %p173 = por %p171, %p172
      %p174 = scmp.ne.s32.totalorder %s165, %s166
      %p175 = scmp.eq.s32.totalorder %s24, 0
      %p176 = por %p174, %p175
      %p177 = scmp.ne.s32.totalorder %s165, %s166
      %p178 = scmp.eq.s32.totalorder %s25, 1
      %p179 = por %p177, %p178
      %p181 = scmp.ne.s32.totalorder %s166, %s180
      %p182 = scmp.eq.s32.totalorder %s25, 0
      %p183 = por %p181, %p182
      %s185 = sadd.s32 %s184, 1
      %p188 = scmp.eq.s32.totalorder %s19, 1
      %p189 = scmp.ne.s32.totalorder %s184, %s186
      %p190 = scmp.eq.s32.totalorder %s19, 0
      %p191 = por %p189, %p190
      %p192 = scmp.ne.s32.totalorder %s184, %s186
      %p193 = scmp.eq.s32.totalorder %s24, 1
      %p194 = por %p192, %p193
      %p195 = scmp.ne.s32.totalorder %s186, %s187
      %p196 = scmp.eq.s32.totalorder %s24, 0
      %p197 = por %p195, %p196
      %p198 = scmp.ne.s32.totalorder %s186, %s187
      %p199 = scmp.eq.s32.totalorder %s25, 1
      %p200 = por %p198, %p199
      %p202 = scmp.ne.s32.totalorder %s187, %s201
      %p203 = scmp.eq.s32.totalorder %s25, 0
      %p204 = por %p202, %p203
      %s206 = sadd.s32 %s205, 1
      %p209 = scmp.eq.s32.totalorder %s19, 1
      %p210 = scmp.ne.s32.totalorder %s205, %s207
      %p211 = scmp.eq.s32.totalorder %s19, 0
      %p212 = por %p210, %p211
      %p213 = scmp.ne.s32.totalorder %s205, %s207
      %p214 = scmp.eq.s32.totalorder %s24, 1
      %p215 = por %p213, %p214
      %p216 = scmp.ne.s32.totalorder %s207, %s208
      %p217 = scmp.eq.s32.totalorder %s24, 0
      %p218 = por %p216, %p217
      %p219 = scmp.ne.s32.totalorder %s207, %s208
      %p220 = scmp.eq.s32.totalorder %s25, 1
      %p221 = por %p219, %p220
      %p223 = scmp.ne.s32.totalorder %s208, %s222
      %p224 = scmp.eq.s32.totalorder %s25, 0
      %p225 = por %p223, %p224
      %s226 = ssub.s32 %s19, %s26
      %p227 = scmp.eq.s32.totalorder %s226, 0
      %s229 = sadd.s32 %s228, 1
      %s230 = scalar_select %p227, %s228, %s229
      %p233 = pneg %p227
      %p234 = scmp.eq.s32.totalorder %s19, 1
      %p235 = por %p233, %p234
      %p236 = scmp.ne.s32.totalorder %s228, %s231
      %p237 = scmp.eq.s32.totalorder %s19, 0
      %p238 = por %p236, %p237
      %p239 = scmp.ne.s32.totalorder %s228, %s231
      %p240 = scmp.eq.s32.totalorder %s24, 1
      %p241 = por %p239, %p240
      %p242 = scmp.ne.s32.totalorder %s231, %s232
      %p243 = scmp.eq.s32.totalorder %s24, 0
      %p244 = por %p242, %p243
      %p245 = scmp.ne.s32.totalorder %s231, %s232
      %p246 = scmp.eq.s32.totalorder %s25, 1
      %p247 = por %p245, %p246
      %p249 = scmp.ne.s32.totalorder %s232, %s248
      %p250 = scmp.eq.s32.totalorder %s25, 0
      %p251 = por %p249, %p250
      %p252 = scmp.le.s32.totalorder 1, %s19
      %p253 = scmp.lt.s32.totalorder %s19, 3
      %p254 = pnand %p252, %p253
      %p255 = pneg %p254
      // Predicated region
      $region9: #{tpu_custom_call.1} parent=5 // pred_check
        _
      $region10: #{tpu_custom_call.1} parent=5 // pred_check_branch
        %257 = sbr.rel (%p254) target = $region12
      $region11: #{tpu_custom_call.1} parent=5 // pred_region
        %s258 = ssub.s32 %s19, 1
        // Predicated region
        $region13: #{tpu_custom_call.1} parent=11 // pred_check
          %p259 = pneg %p92
        $region14: #{tpu_custom_call.1} parent=11 // pred_check_branch
          %261 = sbr.rel (%p259) target = $region16
        $region15: #{tpu_custom_call.1} parent=11 // pred_region
          %s263 = ssub.s32 1024, 1024
          %264 = vsyncadd [#allocation3], %s263
          %s265 = sshll.u32 [#allocation2], 4
          %s266 = int_to_ptr.vmem [resolvable:$true] %s265
          %271 = dma.hbm_to_vmem [thread:$0]  %s2, 1024, %s266, [#allocation3], 128, 128, 8
        $region16: #{tpu_custom_call.1} parent=11 // pred_fallthru
          _
        // Predicated region
        $region17: #{tpu_custom_call.1} parent=11 // pred_check
          %p272 = pneg %p113
        $region18: #{tpu_custom_call.1} parent=11 // pred_check_branch
          %274 = sbr.rel (%p272) target = $region20
        $region19: #{tpu_custom_call.1} parent=11 // pred_region
          _
        $region20: #{tpu_custom_call.1} parent=11 // pred_fallthru
          _
        // Predicated region
        $region21: #{tpu_custom_call.1} parent=11 // pred_check
          %p275 = pneg %p134
        $region22: #{tpu_custom_call.1} parent=11 // pred_check_branch
          %277 = sbr.rel (%p275) target = $region24
        $region23: #{tpu_custom_call.1} parent=11 // pred_region
          _
        $region24: #{tpu_custom_call.1} parent=11 // pred_fallthru
          _
        // Predicated region
        $region25: #{tpu_custom_call.1} parent=11 // pred_check
          %p278 = pneg %p155
        $region26: #{tpu_custom_call.1} parent=11 // pred_check_branch
          %280 = sbr.rel (%p278) target = $region28
        $region27: #{tpu_custom_call.1} parent=11 // pred_region
          _
        $region28: #{tpu_custom_call.1} parent=11 // pred_fallthru
          _
        // Predicated region
        $region29: #{tpu_custom_call.1} parent=11 // pred_check
          %p281 = pneg %p176
        $region30: #{tpu_custom_call.1} parent=11 // pred_check_branch
          %283 = sbr.rel (%p281) target = $region32
        $region31: #{tpu_custom_call.1} parent=11 // pred_region
          _
        $region32: #{tpu_custom_call.1} parent=11 // pred_fallthru
          _
        // Predicated region
        $region33: #{tpu_custom_call.1} parent=11 // pred_check
          %p284 = pneg %p197
        $region34: #{tpu_custom_call.1} parent=11 // pred_check_branch
          %286 = sbr.rel (%p284) target = $region36
        $region35: #{tpu_custom_call.1} parent=11 // pred_region
          _
        $region36: #{tpu_custom_call.1} parent=11 // pred_fallthru
          _
        // Predicated region
        $region37: #{tpu_custom_call.1} parent=11 // pred_check
          %p287 = pneg %p218
        $region38: #{tpu_custom_call.1} parent=11 // pred_check_branch
          %289 = sbr.rel (%p287) target = $region40
        $region39: #{tpu_custom_call.1} parent=11 // pred_region
          _
        $region40: #{tpu_custom_call.1} parent=11 // pred_fallthru
          _
      $region12: #{tpu_custom_call.1} parent=5 // pred_fallthru
        _
      %p290 = scmp.lt.s32.totalorder %s19, 2
      // Predicated region
      $region41: #{tpu_custom_call.1} parent=5 // pred_check
        %p291 = pneg %p290
      $region42: #{tpu_custom_call.1} parent=5 // pred_check_branch
        %293 = sbr.rel (%p291) target = $region44
      $region43: #{tpu_custom_call.1} parent=5 // pred_region
        // Predicated region
        $region45: #{tpu_custom_call.1} parent=43 // pred_check
          %p294 = pneg %p39
        $region46: #{tpu_custom_call.1} parent=43 // pred_check_branch
          %296 = sbr.rel (%p294) target = $region48
        $region47: #{tpu_custom_call.1} parent=43 // pred_region
          %p297 = scmp.lt.s32.totalorder %s19, 1
          %s298 = scalar_select %p297, %s19, 1
          %s299 = smul.addr %s298, 2
          %s300 = scalar_lea.vmem %s0, %s299
        $region48: #{tpu_custom_call.1} parent=43 // pred_fallthru
          _
        // Predicated region
        $region49: #{tpu_custom_call.1} parent=43 // pred_check
          %p301 = pneg %p65
        $region50: #{tpu_custom_call.1} parent=43 // pred_check_branch
          %303 = sbr.rel (%p301) target = $region52
        $region51: #{tpu_custom_call.1} parent=43 // pred_region
          %p304 = scmp.lt.s32.totalorder %s19, 1
          %s305 = scalar_select %p304, %s19, 1
          %s306 = smul.addr %s305, 2
          %s307 = smul.addr %s306, 2
          %s308 = scalar_lea.vmem %s1, %s307
        $region52: #{tpu_custom_call.1} parent=43 // pred_fallthru
          _
      $region44: #{tpu_custom_call.1} parent=5 // pred_fallthru
        _
      %p309 = scmp.le.s32.totalorder 1, %s19
      %p310 = scmp.lt.s32.totalorder %s19, 3
      %p311 = pnand %p309, %p310
      %p312 = pneg %p311
      // Predicated region
      $region53: #{tpu_custom_call.1} parent=5 // pred_check
        _
      $region54: #{tpu_custom_call.1} parent=5 // pred_check_branch
        %314 = sbr.rel (%p311) target = $region56
      $region55: #{tpu_custom_call.1} parent=5 // pred_region
        %s315 = ssub.s32 %s19, 1
        // Predicated region
        $region57: #{tpu_custom_call.1} parent=55 // pred_check
          %p316 = pneg %p92
        $region58: #{tpu_custom_call.1} parent=55 // pred_check_branch
          %318 = sbr.rel (%p316) target = $region60
        $region59: #{tpu_custom_call.1} parent=55 // pred_region
          %319 = dma.done [#allocation3], 1024
        $region60: #{tpu_custom_call.1} parent=55 // pred_fallthru
          _
        %p320 = scmp.lt.s32.totalorder %s24, 1
        %s321 = scalar_select %p320, %s24, 1
        %s322 = smul.addr %s321, 2
        %s323 = scalar_lea.vmem %s0, %s322
        %p324 = pneg %p45
        %p325 = pneg %p42
        %p326 = scmp.lt.s32.totalorder %s24, 1
        %s327 = scalar_select %p326, %s24, 1
        %s328 = smul.addr %s327, 2
        %s329 = smul.addr %s328, 2
        %s330 = scalar_lea.vmem %s1, %s329
        %p331 = pneg %p71
        %p332 = pneg %p68
        %p333 = pneg %p92
        %p334 = pneg %p89
        %p335 = pneg %p113
        %p336 = pneg %p110
        %p337 = pneg %p134
        %p338 = pneg %p131
        %p339 = pneg %p155
        %p340 = pneg %p152
        %p341 = pneg %p176
        %p342 = pneg %p173
        %p343 = pneg %p197
        %p344 = pneg %p194
        %p345 = pneg %p218
        %p346 = pneg %p215
        %p347 = pneg %p244
        %p348 = pneg %p241
        %s349 = sand.u32 %s231, 1
        %s350 = scalar_lea.sflag [#allocation4], %s349
        %s351 = sand.u32 %s231, 1
        %s352 = smul.addr %s351, 8
        %s353 = scalar_lea.vmem [#allocation5], %s352
        %p354 = scmp.lt.s32.totalorder %s24, 1
        %s355 = scalar_select %p354, %s24, 1
        %s356 = smul.addr %s355, 2
        %s357 = scalar_lea.vmem %s0, %s356
        %p358 = scmp.lt.s32.totalorder %s24, 1
        %s359 = scalar_select %p358, %s24, 1
        %s360 = smul.addr %s359, 2
        %s361 = smul.addr %s360, 2
        %s362 = scalar_lea.vmem %s1, %s361
        %v366 = vlaneseq
        %v367 = vand.u32 %v366, 127
        %v368 = vadd.s32 %v367, 128
        %vm369 = vcmp.lt.s32.totalorder %v367, 0
        %v370 = vsub.s32 0, %v367
        %v371 = vsel %vm369, %v370, %v367
        %v372 = vshrl.u32 %v371, 4
        %v373 = vand.u32 %v371, 15
        %v374 = vsub.s32 0, %v373
        %v375 = vsel %vm369, %v374, %v373
        %vm376 = vcmp.lt.s32.totalorder %v368, 0
        %v377 = vsub.s32 0, %v368
        %v378 = vsel %vm376, %v377, %v368
        %v379 = vshrl.u32 %v378, 4
        %v380 = vand.u32 %v378, 15
        %v381 = vsub.s32 0, %v380
        %v382 = vsel %vm376, %v381, %v380
        %vm383 = vcmp.ne.s32.totalorder %v375, 0
        %vm384 = vcmp.ne.s32.totalorder %v382, 0
        %vm385 = vcmp.lt.s32.totalorder %v375, 0
        %vm386 = vcmp.lt.s32.totalorder %v382, 0
        %vm387 = vmand %vm385, %vm383
        %vm388 = vmand %vm386, %vm384
        %v389 = vadd.s32 %v375, 16
        %v390 = vadd.s32 %v382, 16
        %v391 = vsel %vm387, %v389, %v375
        %v392 = vsel %vm388, %v390, %v382
        %vm393 = vcmp.ge.s32.totalorder %v391, 1
        %vm394 = vcmp.ge.s32.totalorder %v392, 1
        %vm395 = vcmp.lt.s32.totalorder %v391, 15
        %vm396 = vcmp.lt.s32.totalorder %v392, 15
        %v397 = vld [vmem:[%s357] sm:$0x3]
        %v398 = vld [vmem:[#allocation2] sm:$0xff]
        %v399 = vld [vmem:[#allocation2 + $0x8] sm:$0xff]
        %v400 = vld [vmem:[#allocation2 + $0x10] sm:$0xff]
        %v401 = vld [vmem:[#allocation2 + $0x18] sm:$0xff]
        %v402 = vld [vmem:[#allocation2 + $0x20] sm:$0xff]
        %v403 = vld [vmem:[#allocation2 + $0x28] sm:$0xff]
        %v404 = vld [vmem:[#allocation2 + $0x30] sm:$0xff]
        %v405 = vld [vmem:[#allocation2 + $0x38] sm:$0xff]
        %v414 = vunpack.c.l.b16 %v398
        %v415 = vunpack.c.h.b16 %v398
        %v416 = vunpack.c.l.b16 %v399
        %v417 = vunpack.c.h.b16 %v399
        %v418 = vunpack.c.l.b16 %v400
        %v419 = vunpack.c.h.b16 %v400
        %v420 = vunpack.c.l.b16 %v401
        %v421 = vunpack.c.h.b16 %v401
        %v422 = vunpack.c.l.b16 %v402
        %v423 = vunpack.c.h.b16 %v402
        %v424 = vunpack.c.l.b16 %v403
        %v425 = vunpack.c.h.b16 %v403
        %v426 = vunpack.c.l.b16 %v404
        %v427 = vunpack.c.h.b16 %v404
        %v428 = vunpack.c.l.b16 %v405
        %v429 = vunpack.c.h.b16 %v405
        %v430 = vpack.c.b16 %v416, %v414
        %v431 = vpack.c.b16 %v417, %v415
        %v432 = vpack.c.b16 %v420, %v418
        %v433 = vpack.c.b16 %v421, %v419
        %v434 = vpack.c.b16 %v424, %v422
        %v435 = vpack.c.b16 %v425, %v423
        %v436 = vpack.c.b16 %v428, %v426
        %v437 = vpack.c.b16 %v429, %v427
        %vm446 = vcmask 523264
        %v448 = vsel %vm446, %v397, 0
        %450 = vmatprep.subr.bf16.mxu0 %v431
        %451 = vmatpush1.bf16.msra.mxu0 %v430
        %452 = vmatprep.subr.bf16.mxu0 %v433
        %453 = vmatpush1.bf16.msra.mxu0 %v432
        %454 = vmatprep.subr.bf16.mxu0 %v435
        %455 = vmatpush1.bf16.msra.mxu0 %v434
        %456 = vmatprep.subr.bf16.mxu0 %v437
        %457 = vmatpush1.bf16.msra.mxu0 %v436
        %458 = vmatprep.subr.bf16.mxu0 0
        %459 = vmatpush1.bf16.msra.mxu0 0
        %460 = vmatprep.subr.bf16.mxu0 0
        %461 = vmatpush1.bf16.msra.mxu0 0
        %462 = vmatprep.subr.bf16.mxu0 0
        %463 = vmatpush1.bf16.msra.mxu0 0
        %464 = vmatprep.subr.bf16.mxu0 0
        %465 = vmatpush1.bf16.msra.mxu0 0
        %466 = vmatprep.subr.bf16.mxu0 0
        %467 = vmatpush1.bf16.msra.mxu0 0
        %468 = vmatprep.subr.bf16.mxu0 0
        %469 = vmatpush1.bf16.msra.mxu0 0
        %470 = vmatprep.subr.bf16.mxu0 0
        %471 = vmatpush1.bf16.msra.mxu0 0
        %472 = vmatprep.subr.bf16.mxu0 0
        %473 = vmatpush1.bf16.msra.mxu0 0
        %474 = vmatprep.subr.bf16.mxu0 0
        %475 = vmatpush1.bf16.msra.mxu0 0
        %476 = vmatprep.subr.bf16.mxu0 0
        %477 = vmatpush1.bf16.msra.mxu0 0
        %478 = vmatprep.subr.bf16.mxu0 0
        %479 = vmatpush1.bf16.msra.mxu0 0
        %480 = vmatprep.subr.bf16.mxu0 0
        %481 = vmatpush1.bf16.msra.mxu0 0
        %482 = vmatprep.mubr.bf16.mxu0 0
        %483 = vmatmul.mubr.bf16.gmra.mrb[0].mxu0 %v448
        %v484 = vpop.f32.mrb[0].mxu0
        %v485 = vadd.f32 0.0, %v484
        %v486 = vpop.f32.mrb[0].mxu0
        %v487 = vadd.f32 0.0, %v486
        %v488 = vpop.f32.mrb[0].mxu0
        %v489 = vpop.f32.mrb[0].mxu0
        %490 = vdwg.mxu0
        %v491 = vld [vmem:[%s3] sm:$0x3]
        %v492 = vld [vmem:[%s4] sm:$0xf]
        %v493 = vpack.c.bf16 %v485, %v485
        %v494 = vpack.c.bf16 %v487, %v487
        %497 = vrot.lane.b32.xlu0 %v493, 17
        %v498 = vpop.permute.xlu0 %497
        %499 = vrot.lane.b32.xlu0 %v494, 17
        %v500 = vpop.permute.xlu0 %499
        %vm501 = vcmask 138240
        %v502 = vsel %vm501, %v498, %v500
        %vm504 = vcmask 138240
        %v507 = vsel %vm504, 0, %v498
        %v510 = vsel %vm504, %v500, 0
        %v512 = vsel %vm393, 1, 0
        %v513 = vsel %vm394, 1, 0
        %vm514 = vcmp.eq.s32.totalorder %v512, 1
        %vm515 = vcmp.eq.s32.totalorder %v513, 1
        %vm516 = vmpackc.low %vm515, %vm514
        %v517 = vsel %vm516, 65537, 0
        %v518 = vlaneseq
        %v519 = vshrl.u32 %v518, 7
        %v520 = vsub.s32 0, %v519
        %v521 = vrot.slane %v517, %v520
        %v522 = vlaneseq
        %v523 = vshrl.u32 %v522, 7
        %v524 = vsub.s32 4, %v523
        %v525 = vrot.slane %v517, %v524
        %vm526 = vcmp.ne.s16.totalorder %v521, 0
        %vm527 = vcmp.ne.s16.totalorder %v525, 0
        %v528 = vsel %vm526, %v507, 0
        %v529 = vsel %vm527, %v502, 0
        %v530 = vsel %vm395, 1, 0
        %v531 = vsel %vm396, 1, 0
        %vm532 = vcmp.eq.s32.totalorder %v530, 1
        %vm533 = vcmp.eq.s32.totalorder %v531, 1
        %vm534 = vmpackc.low %vm533, %vm532
        %v535 = vsel %vm534, 65537, 0
        %v536 = vlaneseq
        %v537 = vshrl.u32 %v536, 7
        %v538 = vsub.s32 0, %v537
        %v539 = vrot.slane %v535, %v538
        %v540 = vlaneseq
        %v541 = vshrl.u32 %v540, 7
        %v542 = vsub.s32 4, %v541
        %v543 = vrot.slane %v535, %v542
        %544 = vrot.lane.b32.xlu0 %v539, 2
        %v545 = vpop.permute.xlu0 %544
        %546 = vrot.lane.b32.xlu0 %v543, 2
        %v547 = vpop.permute.xlu0 %546
        %vm548 = vcmask 15360
        %v549 = vsel %vm548, %v545, %v547
        %vm550 = vcmp.ne.s16.totalorder %v545, 0
        %vm551 = vcmp.ne.s16.totalorder %v549, 0
        %vm552 = vcmp.ne.s16.totalorder %v547, 0
        %v553 = vsel %vm550, %v507, 0
        %v554 = vsel %vm551, %v502, 0
        %v555 = vsel %vm552, %v510, 0
        %556 = vrot.lane.b32.xlu0 %v521, 16
        %v557 = vpop.permute.xlu0 %556
        %558 = vrot.lane.b32.xlu0 %v525, 16
        %v559 = vpop.permute.xlu0 %558
        %vm560 = vcmask 130048
        %v561 = vsel %vm560, %v557, %v559
        %vm562 = vcmp.ne.s16.totalorder %v557, 0
        %vm563 = vcmp.ne.s16.totalorder %v561, 0
        %vm564 = vcmp.ne.s16.totalorder %v559, 0
        %v565 = vsel %vm562, %v507, 0
        %v566 = vsel %vm563, %v502, 0
        %v567 = vsel %vm564, %v510, 0
        %568 = vrot.lane.b32.xlu0 %v539, 18
        %v569 = vpop.permute.xlu0 %568
        %570 = vrot.lane.b32.xlu0 %v543, 18
        %v571 = vpop.permute.xlu0 %570
        %vm572 = vcmask 146432
        %v573 = vsel %vm572, %v569, %v571
        %vm574 = vcmp.ne.s16.totalorder %v569, 0
        %vm575 = vcmp.ne.s16.totalorder %v573, 0
        %vm576 = vcmp.ne.s16.totalorder %v571, 0
        %v577 = vsel %vm574, %v507, 0
        %v578 = vsel %vm575, %v502, 0
        %v579 = vsel %vm576, %v510, 0
        %580 = vrot.lane.b32.xlu0 %v521, 32
        %v581 = vpop.permute.xlu0 %580
        %582 = vrot.lane.b32.xlu0 %v525, 32
        %v583 = vpop.permute.xlu0 %582
        %vm584 = vcmask 261120
        %v585 = vsel %vm584, %v581, %v583
        %vm586 = vcmp.ne.s16.totalorder %v581, 0
        %vm587 = vcmp.ne.s16.totalorder %v585, 0
        %vm588 = vcmp.ne.s16.totalorder %v583, 0
        %v589 = vsel %vm586, %v507, 0
        %v590 = vsel %vm587, %v502, 0
        %v591 = vsel %vm588, %v510, 0
        %592 = vrot.lane.b32.xlu0 %v539, 34
        %v593 = vpop.permute.xlu0 %592
        %594 = vrot.lane.b32.xlu0 %v543, 34
        %v595 = vpop.permute.xlu0 %594
        %vm596 = vcmask 277504
        %v597 = vsel %vm596, %v593, %v595
        %vm598 = vcmp.ne.s16.totalorder %v593, 0
        %vm599 = vcmp.ne.s16.totalorder %v597, 0
        %vm600 = vcmp.ne.s16.totalorder %v595, 0
        %v601 = vsel %vm598, %v507, 0
        %v602 = vsel %vm599, %v502, 0
        %v603 = vsel %vm600, %v510, 0
        %v606 = vrot.slane %v507, 6
        %v607 = vrot.slane %v502, 6
        %v608 = vrot.slane %v510, 6
        %609 = vrot.lane.b32.xlu0 %v606, 127
        %v610 = vpop.permute.xlu0 %609
        %611 = vrot.lane.b32.xlu0 %v607, 127
        %v612 = vpop.permute.xlu0 %611
        %613 = vrot.lane.b32.xlu0 %v608, 127
        %v614 = vpop.permute.xlu0 %613
        %vm615 = vcmask 1039360
        %v616 = vsel %vm615, %v610, %v612
        %v617 = vsel %vm615, %v612, %v614
        %v621 = vrot.slane %v553, 4
        %v622 = vrot.slane %v554, 4
        %v623 = vrot.slane %v555, 4
        %624 = vrot.lane.b32.xlu0 %v621, 126
        %v625 = vpop.permute.xlu0 %624
        %626 = vrot.lane.b32.xlu0 %v622, 126
        %v627 = vpop.permute.xlu0 %626
        %628 = vrot.lane.b32.xlu0 %v623, 126
        %v629 = vpop.permute.xlu0 %628
        %vm630 = vcmask 1031168
        %v631 = vsel %vm630, %v625, %v627
        %v632 = vsel %vm630, %v627, %v629
        %v636 = vrot.slane %v565, 2
        %v637 = vrot.slane %v566, 2
        %v638 = vrot.slane %v567, 2
        %639 = vrot.lane.b32.xlu0 %v636, 112
        %v640 = vpop.permute.xlu0 %639
        %641 = vrot.lane.b32.xlu0 %v637, 112
        %v642 = vpop.permute.xlu0 %641
        %643 = vrot.lane.b32.xlu0 %v638, 112
        %v644 = vpop.permute.xlu0 %643
        %vm645 = vcmask 916480
        %v646 = vsel %vm645, %v640, %v642
        %v647 = vsel %vm645, %v642, %v644
        %648 = vrot.lane.b32.xlu0 %v507, 111
        %v649 = vpop.permute.xlu0 %648
        %650 = vrot.lane.b32.xlu0 %v502, 111
        %v651 = vpop.permute.xlu0 %650
        %652 = vrot.lane.b32.xlu0 %v510, 111
        %v653 = vpop.permute.xlu0 %652
        %vm654 = vcmask 908288
        %v655 = vsel %vm654, %v649, %v651
        %v656 = vsel %vm654, %v651, %v653
        %v660 = vrot.slane %v577, 6
        %v661 = vrot.slane %v578, 6
        %v662 = vrot.slane %v579, 6
        %663 = vrot.lane.b32.xlu0 %v660, 110
        %v664 = vpop.permute.xlu0 %663
        %665 = vrot.lane.b32.xlu0 %v661, 110
        %v666 = vpop.permute.xlu0 %665
        %667 = vrot.lane.b32.xlu0 %v662, 110
        %v668 = vpop.permute.xlu0 %667
        %vm669 = vcmask 900096
        %v670 = vsel %vm669, %v664, %v666
        %v671 = vsel %vm669, %v666, %v668
        %v675 = vrot.slane %v589, 4
        %v676 = vrot.slane %v590, 4
        %v677 = vrot.slane %v591, 4
        %678 = vrot.lane.b32.xlu0 %v675, 96
        %v679 = vpop.permute.xlu0 %678
        %680 = vrot.lane.b32.xlu0 %v676, 96
        %v681 = vpop.permute.xlu0 %680
        %682 = vrot.lane.b32.xlu0 %v677, 96
        %v683 = vpop.permute.xlu0 %682
        %vm684 = vcmask 785408
        %v685 = vsel %vm684, %v679, %v681
        %v686 = vsel %vm684, %v681, %v683
        %v687 = vrot.slane %v507, 2
        %v688 = vrot.slane %v502, 2
        %v689 = vrot.slane %v510, 2
        %690 = vrot.lane.b32.xlu0 %v687, 95
        %v691 = vpop.permute.xlu0 %690
        %692 = vrot.lane.b32.xlu0 %v688, 95
        %v693 = vpop.permute.xlu0 %692
        %694 = vrot.lane.b32.xlu0 %v689, 95
        %v695 = vpop.permute.xlu0 %694
        %vm696 = vcmask 777216
        %v697 = vsel %vm696, %v691, %v693
        %v698 = vsel %vm696, %v693, %v695
        %702 = vrot.lane.b32.xlu0 %v601, 94
        %v703 = vpop.permute.xlu0 %702
        %704 = vrot.lane.b32.xlu0 %v602, 94
        %v705 = vpop.permute.xlu0 %704
        %706 = vrot.lane.b32.xlu0 %v603, 94
        %v707 = vpop.permute.xlu0 %706
        %vm708 = vcmask 769024
        %v709 = vsel %vm708, %v703, %v705
        %v710 = vsel %vm708, %v705, %v707
        %vm711 = vcmask 1041408
        %v714 = vsel %vm711, %v528, %v616
        %v717 = vsel %vm711, %v529, %v617
        %vm718 = vcmask 1043456
        %v720 = vsel %vm718, %v714, %v631
        %v722 = vsel %vm718, %v717, %v632
        %vm723 = vcmask 1045504
        %v725 = vsel %vm723, %v720, %v646
        %v728 = vsel %vm723, %v722, %v647
        %v732 = vsel %vm711, %v655, %v670
        %v735 = vsel %vm711, %v656, %v671
        %v737 = vsel %vm718, %v732, %v685
        %v739 = vsel %vm718, %v735, %v686
        %v741 = vsel %vm723, %v737, %v697
        %v744 = vsel %vm723, %v739, %v698
        %747 = vset.pattern.permute.xlu0 0
        %748 = vperm.xlu0 %747, %v492
        %v749 = vpop.permute.xlu0 %748
        %vm751 = vcmask 293888
        %v753 = vsel %vm751, %v491, 0
        %v756 = vsel %vm711, %v709, 0
        %v759 = vsel %vm711, %v710, 0
        %761 = vmatprep.subr.bf16.mxu0 %v728
        %762 = vmatpush1.bf16.msra.mxu0 %v725
        %763 = vmatprep.subr.bf16.mxu0 %v744
        %764 = vmatpush1.bf16.msra.mxu0 %v741
        %765 = vmatprep.subr.bf16.mxu0 %v759
        %766 = vmatpush1.bf16.msra.mxu0 %v756
        %767 = vmatprep.subr.bf16.mxu0 0
        %768 = vmatpush1.bf16.msra.mxu0 0
        %769 = vmatprep.subr.bf16.mxu0 0
        %770 = vmatpush1.bf16.msra.mxu0 0
        %771 = vmatprep.subr.bf16.mxu0 0
        %772 = vmatpush1.bf16.msra.mxu0 0
        %773 = vmatprep.subr.bf16.mxu0 0
        %774 = vmatpush1.bf16.msra.mxu0 0
        %775 = vmatprep.subr.bf16.mxu0 0
        %776 = vmatpush1.bf16.msra.mxu0 0
        %777 = vmatprep.subr.bf16.mxu0 0
        %778 = vmatpush1.bf16.msra.mxu0 0
        %779 = vmatprep.subr.bf16.mxu0 0
        %780 = vmatpush1.bf16.msra.mxu0 0
        %781 = vmatprep.subr.bf16.mxu0 0
        %782 = vmatpush1.bf16.msra.mxu0 0
        %783 = vmatprep.subr.bf16.mxu0 0
        %784 = vmatpush1.bf16.msra.mxu0 0
        %785 = vmatprep.subr.bf16.mxu0 0
        %786 = vmatpush1.bf16.msra.mxu0 0
        %787 = vmatprep.subr.bf16.mxu0 0
        %788 = vmatpush1.bf16.msra.mxu0 0
        %789 = vmatprep.subr.bf16.mxu0 0
        %790 = vmatpush1.bf16.msra.mxu0 0
        %791 = vmatprep.subr.bf16.mxu0 0
        %792 = vmatpush1.bf16.msra.mxu0 0
        %793 = vmatprep.mubr.bf16.mxu0 0
        %794 = vmatmul.mubr.bf16.gmra.mrb[0].mxu0 %v753
        %v795 = vpop.f32.mrb[0].mxu0
        %v796 = vadd.f32 %v749, %v795
        %v797 = vpop.f32.mrb[0].mxu0
        %v798 = vadd.f32 %v749, %v797
        %v799 = vpop.f32.mrb[0].mxu0
        %v800 = vpop.f32.mrb[0].mxu0
        %801 = vdwg.mxu0
        %v802 = vpack.c.bf16 %v796, %v796
        %v803 = vpack.c.bf16 %v798, %v798
        %v804 = vld [vmem:[%s362] sm:$0xf]
        %v806 = vcombine.low %v804, %v804
        %v808 = vunpack.c.l.s4 1983009808
        %v809 = vunpack.c.0.s8 %v808
        %v810 = vlaneseq
        %v811 = vshrl.u32 %v810, 7
        %v812 = vsub.s32 %v809, %v811
        %v813 = vrot.slane %v806, %v812
        %v814 = vcombine.high %v813, %v813
        %v817 = vsel %vm711, %v802, %v813
        %v820 = vsel %vm711, %v803, %v814
        %v821 = vld [vmem:[%s5] sm:$0xf]
        %v822 = vld [vmem:[%s6] sm:$0xff]
        %825 = vrot.lane.b32.xlu0 %v817, 17
        %v826 = vpop.permute.xlu0 %825
        %827 = vrot.lane.b32.xlu0 %v820, 17
        %v828 = vpop.permute.xlu0 %827
        %v829 = vsel %vm501, %v826, %v828
        %v832 = vsel %vm504, 0, %v826
        %v835 = vsel %vm504, %v828, 0
        %v837 = vsel %vm526, %v832, 0
        %v838 = vsel %vm527, %v829, 0
        %v839 = vsel %vm550, %v832, 0
        %v840 = vsel %vm551, %v829, 0
        %v841 = vsel %vm552, %v835, 0
        %v842 = vsel %vm562, %v832, 0
        %v843 = vsel %vm563, %v829, 0
        %v844 = vsel %vm564, %v835, 0
        %v845 = vsel %vm574, %v832, 0
        %v846 = vsel %vm575, %v829, 0
        %v847 = vsel %vm576, %v835, 0
        %v848 = vsel %vm586, %v832, 0
        %v849 = vsel %vm587, %v829, 0
        %v850 = vsel %vm588, %v835, 0
        %v851 = vsel %vm598, %v832, 0
        %v852 = vsel %vm599, %v829, 0
        %v853 = vsel %vm600, %v835, 0
        %v856 = vrot.slane %v832, 4
        %v857 = vrot.slane %v829, 4
        %v858 = vrot.slane %v835, 4
        %859 = vrot.lane.b32.xlu0 %v856, 127
        %v860 = vpop.permute.xlu0 %859
        %861 = vrot.lane.b32.xlu0 %v857, 127
        %v862 = vpop.permute.xlu0 %861
        %863 = vrot.lane.b32.xlu0 %v858, 127
        %v864 = vpop.permute.xlu0 %863
        %v865 = vsel %vm615, %v860, %v862
        %v866 = vsel %vm615, %v862, %v864
        %870 = vrot.lane.b32.xlu0 %v839, 126
        %v871 = vpop.permute.xlu0 %870
        %872 = vrot.lane.b32.xlu0 %v840, 126
        %v873 = vpop.permute.xlu0 %872
        %874 = vrot.lane.b32.xlu0 %v841, 126
        %v875 = vpop.permute.xlu0 %874
        %v876 = vsel %vm630, %v871, %v873
        %v877 = vsel %vm630, %v873, %v875
        %v881 = vrot.slane %v842, 4
        %v882 = vrot.slane %v843, 4
        %v883 = vrot.slane %v844, 4
        %884 = vrot.lane.b32.xlu0 %v881, 112
        %v885 = vpop.permute.xlu0 %884
        %886 = vrot.lane.b32.xlu0 %v882, 112
        %v887 = vpop.permute.xlu0 %886
        %888 = vrot.lane.b32.xlu0 %v883, 112
        %v889 = vpop.permute.xlu0 %888
        %v890 = vsel %vm645, %v885, %v887
        %v891 = vsel %vm645, %v887, %v889
        %892 = vrot.lane.b32.xlu0 %v832, 111
        %v893 = vpop.permute.xlu0 %892
        %894 = vrot.lane.b32.xlu0 %v829, 111
        %v895 = vpop.permute.xlu0 %894
        %896 = vrot.lane.b32.xlu0 %v835, 111
        %v897 = vpop.permute.xlu0 %896
        %v898 = vsel %vm654, %v893, %v895
        %v899 = vsel %vm654, %v895, %v897
        %v903 = vrot.slane %v845, 4
        %v904 = vrot.slane %v846, 4
        %v905 = vrot.slane %v847, 4
        %906 = vrot.lane.b32.xlu0 %v903, 110
        %v907 = vpop.permute.xlu0 %906
        %908 = vrot.lane.b32.xlu0 %v904, 110
        %v909 = vpop.permute.xlu0 %908
        %910 = vrot.lane.b32.xlu0 %v905, 110
        %v911 = vpop.permute.xlu0 %910
        %v912 = vsel %vm669, %v907, %v909
        %v913 = vsel %vm669, %v909, %v911
        %917 = vrot.lane.b32.xlu0 %v848, 96
        %v918 = vpop.permute.xlu0 %917
        %919 = vrot.lane.b32.xlu0 %v849, 96
        %v920 = vpop.permute.xlu0 %919
        %921 = vrot.lane.b32.xlu0 %v850, 96
        %v922 = vpop.permute.xlu0 %921
        %v923 = vsel %vm684, %v918, %v920
        %v924 = vsel %vm684, %v920, %v922
        %925 = vrot.lane.b32.xlu0 %v856, 95
        %v926 = vpop.permute.xlu0 %925
        %927 = vrot.lane.b32.xlu0 %v857, 95
        %v928 = vpop.permute.xlu0 %927
        %929 = vrot.lane.b32.xlu0 %v858, 95
        %v930 = vpop.permute.xlu0 %929
        %v931 = vsel %vm696, %v926, %v928
        %v932 = vsel %vm696, %v928, %v930
        %936 = vrot.lane.b32.xlu0 %v851, 94
        %v937 = vpop.permute.xlu0 %936
        %938 = vrot.lane.b32.xlu0 %v852, 94
        %v939 = vpop.permute.xlu0 %938
        %940 = vrot.lane.b32.xlu0 %v853, 94
        %v941 = vpop.permute.xlu0 %940
        %v942 = vsel %vm708, %v937, %v939
        %v943 = vsel %vm708, %v939, %v941
        %v946 = vsel %vm718, %v837, %v865
        %v950 = vsel %vm718, %v838, %v866
        %v954 = vsel %vm718, %v876, %v890
        %v958 = vsel %vm718, %v877, %v891
        %v962 = vsel %vm718, %v898, %v912
        %v966 = vsel %vm718, %v899, %v913
        %v970 = vsel %vm718, %v923, %v931
        %v974 = vsel %vm718, %v924, %v932
        %977 = vset.pattern.permute.xlu0 0
        %978 = vperm.xlu0 %977, %v822
        %v979 = vpop.permute.xlu0 %978
        %vm981 = vcmask 588800
        %v983 = vsel %vm981, %v821, 0
        %v986 = vsel %vm718, %v942, 0
        %v989 = vsel %vm718, %v943, 0
        %991 = vmatprep.subr.bf16.mxu0 %v950
        %992 = vmatpush1.bf16.msra.mxu0 %v946
        %993 = vmatprep.subr.bf16.mxu0 %v958
        %994 = vmatpush1.bf16.msra.mxu0 %v954
        %995 = vmatprep.subr.bf16.mxu0 %v966
        %996 = vmatpush1.bf16.msra.mxu0 %v962
        %997 = vmatprep.subr.bf16.mxu0 %v974
        %998 = vmatpush1.bf16.msra.mxu0 %v970
        %999 = vmatprep.subr.bf16.mxu0 %v989
        %1000 = vmatpush1.bf16.msra.mxu0 %v986
        %1001 = vmatprep.subr.bf16.mxu0 0
        %1002 = vmatpush1.bf16.msra.mxu0 0
        %1003 = vmatprep.subr.bf16.mxu0 0
        %1004 = vmatpush1.bf16.msra.mxu0 0
        %1005 = vmatprep.subr.bf16.mxu0 0
        %1006 = vmatpush1.bf16.msra.mxu0 0
        %1007 = vmatprep.subr.bf16.mxu0 0
        %1008 = vmatpush1.bf16.msra.mxu0 0
        %1009 = vmatprep.subr.bf16.mxu0 0
        %1010 = vmatpush1.bf16.msra.mxu0 0
        %1011 = vmatprep.subr.bf16.mxu0 0
        %1012 = vmatpush1.bf16.msra.mxu0 0
        %1013 = vmatprep.subr.bf16.mxu0 0
        %1014 = vmatpush1.bf16.msra.mxu0 0
        %1015 = vmatprep.subr.bf16.mxu0 0
        %1016 = vmatpush1.bf16.msra.mxu0 0
        %1017 = vmatprep.subr.bf16.mxu0 0
        %1018 = vmatpush1.bf16.msra.mxu0 0
        %1019 = vmatprep.subr.bf16.mxu0 0
        %1020 = vmatpush1.bf16.msra.mxu0 0
        %1021 = vmatprep.subr.bf16.mxu0 0
        %1022 = vmatpush1.bf16.msra.mxu0 0
        %1023 = vmatprep.mubr.bf16.mxu0 0
        %1024 = vmatmul.mubr.bf16.gmra.mrb[0].mxu0 %v983
        %v1025 = vpop.f32.mrb[0].mxu0
        %v1026 = vadd.f32 %v979, %v1025
        %v1027 = vpop.f32.mrb[0].mxu0
        %v1028 = vadd.f32 %v979, %v1027
        %v1029 = vpop.f32.mrb[0].mxu0
        %v1030 = vpop.f32.mrb[0].mxu0
        %1031 = vdwg.mxu0
        %v1032 = vmax.f32 %v1026, 0.0
        %v1033 = vmax.f32 %v1028, 0.0
        %v1034 = vld [vmem:[%s7] sm:$0x3]
        %v1035 = vld [vmem:[%s8] sm:$0xf]
        %v1036 = vpack.c.bf16 %v1032, %v1032
        %v1037 = vpack.c.bf16 %v1033, %v1033
        %1040 = vrot.lane.b32.xlu0 %v1036, 17
        %v1041 = vpop.permute.xlu0 %1040
        %1042 = vrot.lane.b32.xlu0 %v1037, 17
        %v1043 = vpop.permute.xlu0 %1042
        %v1044 = vsel %vm501, %v1041, %v1043
        %v1047 = vsel %vm504, 0, %v1041
        %v1050 = vsel %vm504, %v1043, 0
        %v1052 = vsel %vm526, %v1047, 0
        %v1053 = vsel %vm527, %v1044, 0
        %v1054 = vsel %vm550, %v1047, 0
        %v1055 = vsel %vm551, %v1044, 0
        %v1056 = vsel %vm552, %v1050, 0
        %v1057 = vsel %vm562, %v1047, 0
        %v1058 = vsel %vm563, %v1044, 0
        %v1059 = vsel %vm564, %v1050, 0
        %v1060 = vsel %vm574, %v1047, 0
        %v1061 = vsel %vm575, %v1044, 0
        %v1062 = vsel %vm576, %v1050, 0
        %v1063 = vsel %vm586, %v1047, 0
        %v1064 = vsel %vm587, %v1044, 0
        %v1065 = vsel %vm588, %v1050, 0
        %v1066 = vsel %vm598, %v1047, 0
        %v1067 = vsel %vm599, %v1044, 0
        %v1068 = vsel %vm600, %v1050, 0
        %v1071 = vrot.slane %v1047, 4
        %v1072 = vrot.slane %v1044, 4
        %v1073 = vrot.slane %v1050, 4
        %1074 = vrot.lane.b32.xlu0 %v1071, 127
        %v1075 = vpop.permute.xlu0 %1074
        %1076 = vrot.lane.b32.xlu0 %v1072, 127
        %v1077 = vpop.permute.xlu0 %1076
        %1078 = vrot.lane.b32.xlu0 %v1073, 127
        %v1079 = vpop.permute.xlu0 %1078
        %v1080 = vsel %vm615, %v1075, %v1077
        %v1081 = vsel %vm615, %v1077, %v1079
        %1085 = vrot.lane.b32.xlu0 %v1054, 126
        %v1086 = vpop.permute.xlu0 %1085
        %1087 = vrot.lane.b32.xlu0 %v1055, 126
        %v1088 = vpop.permute.xlu0 %1087
        %1089 = vrot.lane.b32.xlu0 %v1056, 126
        %v1090 = vpop.permute.xlu0 %1089
        %v1091 = vsel %vm630, %v1086, %v1088
        %v1092 = vsel %vm630, %v1088, %v1090
        %v1096 = vrot.slane %v1057, 4
        %v1097 = vrot.slane %v1058, 4
        %v1098 = vrot.slane %v1059, 4
        %1099 = vrot.lane.b32.xlu0 %v1096, 112
        %v1100 = vpop.permute.xlu0 %1099
        %1101 = vrot.lane.b32.xlu0 %v1097, 112
        %v1102 = vpop.permute.xlu0 %1101
        %1103 = vrot.lane.b32.xlu0 %v1098, 112
        %v1104 = vpop.permute.xlu0 %1103
        %v1105 = vsel %vm645, %v1100, %v1102
        %v1106 = vsel %vm645, %v1102, %v1104
        %1107 = vrot.lane.b32.xlu0 %v1047, 111
        %v1108 = vpop.permute.xlu0 %1107
        %1109 = vrot.lane.b32.xlu0 %v1044, 111
        %v1110 = vpop.permute.xlu0 %1109
        %1111 = vrot.lane.b32.xlu0 %v1050, 111
        %v1112 = vpop.permute.xlu0 %1111
        %v1113 = vsel %vm654, %v1108, %v1110
        %v1114 = vsel %vm654, %v1110, %v1112
        %v1118 = vrot.slane %v1060, 4
        %v1119 = vrot.slane %v1061, 4
        %v1120 = vrot.slane %v1062, 4
        %1121 = vrot.lane.b32.xlu0 %v1118, 110
        %v1122 = vpop.permute.xlu0 %1121
        %1123 = vrot.lane.b32.xlu0 %v1119, 110
        %v1124 = vpop.permute.xlu0 %1123
        %1125 = vrot.lane.b32.xlu0 %v1120, 110
        %v1126 = vpop.permute.xlu0 %1125
        %v1127 = vsel %vm669, %v1122, %v1124
        %v1128 = vsel %vm669, %v1124, %v1126
        %1132 = vrot.lane.b32.xlu0 %v1063, 96
        %v1133 = vpop.permute.xlu0 %1132
        %1134 = vrot.lane.b32.xlu0 %v1064, 96
        %v1135 = vpop.permute.xlu0 %1134
        %1136 = vrot.lane.b32.xlu0 %v1065, 96
        %v1137 = vpop.permute.xlu0 %1136
        %v1138 = vsel %vm684, %v1133, %v1135
        %v1139 = vsel %vm684, %v1135, %v1137
        %1140 = vrot.lane.b32.xlu0 %v1071, 95
        %v1141 = vpop.permute.xlu0 %1140
        %1142 = vrot.lane.b32.xlu0 %v1072, 95
        %v1143 = vpop.permute.xlu0 %1142
        %1144 = vrot.lane.b32.xlu0 %v1073, 95
        %v1145 = vpop.permute.xlu0 %1144
        %v1146 = vsel %vm696, %v1141, %v1143
        %v1147 = vsel %vm696, %v1143, %v1145
        %1151 = vrot.lane.b32.xlu0 %v1066, 94
        %v1152 = vpop.permute.xlu0 %1151
        %1153 = vrot.lane.b32.xlu0 %v1067, 94
        %v1154 = vpop.permute.xlu0 %1153
        %1155 = vrot.lane.b32.xlu0 %v1068, 94
        %v1156 = vpop.permute.xlu0 %1155
        %v1157 = vsel %vm708, %v1152, %v1154
        %v1158 = vsel %vm708, %v1154, %v1156
        %v1161 = vsel %vm718, %v1052, %v1080
        %v1165 = vsel %vm718, %v1053, %v1081
        %v1169 = vsel %vm718, %v1091, %v1105
        %v1173 = vsel %vm718, %v1092, %v1106
        %v1177 = vsel %vm718, %v1113, %v1127
        %v1181 = vsel %vm718, %v1114, %v1128
        %v1185 = vsel %vm718, %v1138, %v1146
        %v1189 = vsel %vm718, %v1139, %v1147
        %1192 = vset.pattern.permute.xlu0 0
        %1193 = vperm.xlu0 %1192, %v1035
        %v1194 = vpop.permute.xlu0 %1193
        %v1197 = vsel %vm981, %v1034, 0
        %v1200 = vsel %vm718, %v1157, 0
        %v1203 = vsel %vm718, %v1158, 0
        %1205 = vmatprep.subr.bf16.mxu0 %v1165
        %1206 = vmatpush1.bf16.msra.mxu0 %v1161
        %1207 = vmatprep.subr.bf16.mxu0 %v1173
        %1208 = vmatpush1.bf16.msra.mxu0 %v1169
        %1209 = vmatprep.subr.bf16.mxu0 %v1181
        %1210 = vmatpush1.bf16.msra.mxu0 %v1177
        %1211 = vmatprep.subr.bf16.mxu0 %v1189
        %1212 = vmatpush1.bf16.msra.mxu0 %v1185
        %1213 = vmatprep.subr.bf16.mxu0 %v1203
        %1214 = vmatpush1.bf16.msra.mxu0 %v1200
        %1215 = vmatprep.subr.bf16.mxu0 0
        %1216 = vmatpush1.bf16.msra.mxu0 0
        %1217 = vmatprep.subr.bf16.mxu0 0
        %1218 = vmatpush1.bf16.msra.mxu0 0
        %1219 = vmatprep.subr.bf16.mxu0 0
        %1220 = vmatpush1.bf16.msra.mxu0 0
        %1221 = vmatprep.subr.bf16.mxu0 0
        %1222 = vmatpush1.bf16.msra.mxu0 0
        %1223 = vmatprep.subr.bf16.mxu0 0
        %1224 = vmatpush1.bf16.msra.mxu0 0
        %1225 = vmatprep.subr.bf16.mxu0 0
        %1226 = vmatpush1.bf16.msra.mxu0 0
        %1227 = vmatprep.subr.bf16.mxu0 0
        %1228 = vmatpush1.bf16.msra.mxu0 0
        %1229 = vmatprep.subr.bf16.mxu0 0
        %1230 = vmatpush1.bf16.msra.mxu0 0
        %1231 = vmatprep.subr.bf16.mxu0 0
        %1232 = vmatpush1.bf16.msra.mxu0 0
        %1233 = vmatprep.subr.bf16.mxu0 0
        %1234 = vmatpush1.bf16.msra.mxu0 0
        %1235 = vmatprep.subr.bf16.mxu0 0
        %1236 = vmatpush1.bf16.msra.mxu0 0
        %1237 = vmatprep.mubr.bf16.mxu0 0
        %1238 = vmatmul.mubr.bf16.gmra.mrb[0].mxu0 %v1197
        %v1239 = vpop.f32.mrb[0].mxu0
        %v1240 = vadd.f32 %v1194, %v1239
        %v1241 = vpop.f32.mrb[0].mxu0
        %v1242 = vadd.f32 %v1194, %v1241
        %v1243 = vpop.f32.mrb[0].mxu0
        %v1244 = vpop.f32.mrb[0].mxu0
        %1245 = vdwg.mxu0
        %v1246 = vmax.f32 %v1240, 0.0
        %v1247 = vmax.f32 %v1242, 0.0
        %v1250 = vcombine.low %v1246, %v1247
        %1252 = vst [vmem:[%s353] sm:$0xff] %v1250
        %s1253 = sand.u32 %s231, 1
        %s1254 = scalar_lea.sflag [#allocation4], %s1253
        %s1255 = sand.u32 %s231, 1
        %s1256 = smul.addr %s1255, 8
        %s1257 = scalar_lea.vmem [#allocation5], %s1256
        // Predicated region
        $region61: #{tpu_custom_call.1} parent=55 // pred_check
          %p1258 = pneg %p241
        $region62: #{tpu_custom_call.1} parent=55 // pred_check_branch
          %1260 = sbr.rel (%p1258) target = $region64
        $region63: #{tpu_custom_call.1} parent=55 // pred_region
          %s1262 = ssub.s32 128, 128
          %1263 = vsyncadd %s1254, %s1262
          %s1264 = smul.addr %s24, 2
          %s1265 = smul.addr %s1264, 64
          %s1266 = scalar_lea.hbm %s9, %s1265
          %s1268 = sshll.u32 %s1257, 4
          %s1269 = int_to_ptr.vmem [resolvable:$true] %s1268
          %1271 = dma.vmem_to_hbm [thread:$0]  %s1269, 128, %s1266, %s1254
        $region64: #{tpu_custom_call.1} parent=55 // pred_fallthru
          _
      $region56: #{tpu_custom_call.1} parent=5 // pred_fallthru
        _
      %p1272 = scmp.le.s32.totalorder 2, %s19
      // Predicated region
      $region65: #{tpu_custom_call.1} parent=5 // pred_check
        %p1273 = pneg %p1272
      $region66: #{tpu_custom_call.1} parent=5 // pred_check_branch
        %1275 = sbr.rel (%p1273) target = $region68
      $region67: #{tpu_custom_call.1} parent=5 // pred_region
        %s1276 = ssub.s32 %s19, 2
        // Predicated region
        $region69: #{tpu_custom_call.1} parent=67 // pred_check
          %p1277 = pneg %p247
        $region70: #{tpu_custom_call.1} parent=67 // pred_check_branch
          %1279 = sbr.rel (%p1277) target = $region72
        $region71: #{tpu_custom_call.1} parent=67 // pred_region
          %s1280 = sand.u32 %s232, 1
          %s1281 = scalar_lea.sflag [#allocation4], %s1280
          %s1282 = sand.u32 %s232, 1
          %s1283 = smul.addr %s1282, 8
          %s1284 = scalar_lea.vmem [#allocation5], %s1283
          %1285 = dma.done %s1281, 128
        $region72: #{tpu_custom_call.1} parent=67 // pred_fallthru
          _
      $region68: #{tpu_custom_call.1} parent=5 // pred_fallthru
        _
    $region6: #{tpu_custom_call.1} parent=1 // loop_footer
      %s23 = sadd.s32 1, %s19
    $region7: #{tpu_custom_call.1} parent=1 // loop_footer_branch
      %18 = sbr.rel target = $region3
    $region8: #{tpu_custom_call.1} parent=1 // loop_exit
      _
    %1286 = vsyncpa [#allocation3], 1
    %s1287 = scalar_lea.sflag [#allocation3], 1
    %1288 = vsyncpa %s1287, 1
    %1289 = vsyncpa [#allocation4], 1
    %s1290 = scalar_lea.sflag [#allocation4], 1
    %1291 = vsyncpa %s1290, 1

</llo_original>
